<compile_context>
chip_gen: v7x
topology: tpu7x:2x2x1
jax: 0.10.0
libtpu: 0.0.40
codegen_flags: <defaults>
</compile_context>

<pallas_src>
import functools

import jax
import jax.numpy as jnp
from jax.experimental import pallas as pl
from jax.experimental.pallas import tpu as pltpu

_H_PAD = 128            # padded hidden / output lane width


def _mix32(h):
    """Murmur3-style 32-bit finalizer, int32-only (logical shifts via masks)."""
    h = h ^ ((h >> 16) & 0xFFFF)
    h = h * jnp.int32(-2048144789)      # 0x85EBCA6B
    h = h ^ ((h >> 13) & 0x7FFFF)
    h = h * jnp.int32(-1028477387)      # 0xC2B2AE35
    h = h ^ ((h >> 16) & 0xFFFF)
    return h


def _mlp_kernel(seed_ref,                                  # scalar prefetch (SMEM)
                x_ref,
                w1_ref, b1_ref, w2_ref, b2_ref, w3_ref, b3_ref,
                w4_ref, b4_ref, w5_ref, b5_ref,
                o_ref,
                *, elementwise_dtype):
    tile_b = x_ref.shape[0]
    row0 = pl.program_id(0) * tile_b            # global row offset of this tile
    seed = seed_ref[0]

    # Dropout randomness: one hash per element (hoisted out of the layers);
    # layer l consumes bit l of the same hash as its keep mask.
    rows = jax.lax.broadcasted_iota(jnp.int32, (tile_b, _H_PAD), 0) + row0
    cols = jax.lax.broadcasted_iota(jnp.int32, (tile_b, _H_PAD), 1)
    bits = _mix32((rows * jnp.int32(_H_PAD) + cols) ^ seed)

    def linear(h, w_ref, b_ref):
        # bf16 operands on the MXU, f32 accumulation, f32 bias add.
        return jnp.dot(h.astype(w_ref.dtype), w_ref[...],
                       preferred_element_type=jnp.float32) + b_ref[...]

    def relu_dropout(z_f32, layer_idx):
        # Fused ReLU + dropout(p=0.5): keep iff hash bit set AND z > 0.
        # The 2x keep-rescale is folded into the next layer's weights.
        z = z_f32.astype(elementwise_dtype)
        keep = ((bits >> layer_idx) & 1) != 0
        return jnp.where(keep & (z > 0), z, jnp.zeros_like(z))

    h = x_ref[...]                                            # already bf16
    h = relu_dropout(linear(h, w1_ref, b1_ref), 0)
    h = relu_dropout(linear(h, w2_ref, b2_ref), 1)
    h = relu_dropout(linear(h, w3_ref, b3_ref), 2)
    h = relu_dropout(linear(h, w4_ref, b4_ref), 3)

    z = linear(h, w5_ref, b5_ref)               # (tile_b, 128); cols 1..127 == 0
    # Padded w5 columns / b5 entries are exactly zero, so the lane-sum equals
    # column 0 exactly; this gives a (tile_b, 1) value for the narrow store.
    col = jnp.sum(z, axis=-1, keepdims=True)
    # sigmoid via a single EUP tanh: sigmoid(z) = 0.5 * (tanh(z/2) + 1)
    o_ref[...] = (0.5 * (jnp.tanh(0.5 * col) + 1.0)).astype(o_ref.dtype)


def prepare_params(params, compute_dtype=jnp.bfloat16):
    """One-time prep: pad hidden dims to 128 lanes, fold the dropout 2x rescale
    into w2..w5, and cast weights to the MXU compute dtype (biases stay f32).
    Call once and reuse the result across forward calls."""
    def pad(a, rows, cols):
        return jnp.pad(a, ((0, rows - a.shape[0]), (0, cols - a.shape[1])))

    in_features = params["w1"].shape[0]
    prepped = {
        "w1": pad(params["w1"], in_features, _H_PAD).astype(compute_dtype),
        "b1": pad(params["b1"], 1, _H_PAD).astype(jnp.float32),
    }
    for k in ("2", "3", "4", "5"):
        w = params["w" + k] * 2.0                # fold dropout 1/(1-p) rescale
        prepped["w" + k] = pad(w, _H_PAD, _H_PAD).astype(compute_dtype)
        prepped["b" + k] = pad(params["b" + k], 1, _H_PAD).astype(jnp.float32)
    return prepped


def _auto_tile(batch):
    """Largest batch tile (<=1024) that divides B; prefer >=2 grid steps so the
    'parallel' batch axis can shard across v7x's two TensorCores."""
    for t in (1024, 512, 256, 128):
        if batch % t == 0 and batch // t >= 2:
            return t
    for t in (1024, 512, 256, 128):
        if batch % t == 0:
            return t
    return batch


def neural_network_forward(x, prepped_params, seed, *, tile_b=None,
                           elementwise_dtype=jnp.bfloat16):
    """x: (B, input_size) f32/bf16. prepped_params: output of prepare_params().
    On v5e pass elementwise_dtype=jnp.float32 (no bf16 VPU there)."""
    B, in_features = x.shape
    if tile_b is None:
        tile_b = _auto_tile(B)
    tile_b = min(tile_b, B)
    assert B % tile_b == 0, "batch must be divisible by tile_b"

    p = prepped_params
    x = x.astype(p["w1"].dtype)                  # bf16 input: half the DMA bytes

    const_spec = lambda a: pl.BlockSpec(a.shape, lambda i, s: (0, 0))
    in_specs = [pl.BlockSpec((tile_b, in_features), lambda i, s: (i, 0))]
    flat_params = []
    for k in ("1", "2", "3", "4", "5"):
        w, b = p["w" + k], p["b" + k]
        in_specs += [const_spec(w), const_spec(b)]
        flat_params += [w, b]

    grid_spec = pltpu.PrefetchScalarGridSpec(
        num_scalar_prefetch=1,
        grid=(B // tile_b,),
        in_specs=in_specs,
        out_specs=pl.BlockSpec((tile_b, 1), lambda i, s: (i, 0)),
        scratch_shapes=[],
    )

    fn = pl.pallas_call(
        functools.partial(_mlp_kernel, elementwise_dtype=elementwise_dtype),
        grid_spec=grid_spec,
        out_shape=jax.ShapeDtypeStruct((B, 1), jnp.float32),
        compiler_params=pltpu.CompilerParams(
            dimension_semantics=("parallel",),
        ),
    )
    seed_arr = jnp.asarray([seed], dtype=jnp.int32)
    return fn(seed_arr, x, *flat_params)         # (B, 1) directly, no slice pass


def init_params(key, input_size, hidden_size):
    """Deterministic synthetic init mirroring nn.Linear shapes (transposed)."""
    sizes = [(input_size, hidden_size),
             (hidden_size, hidden_size),
             (hidden_size, hidden_size),
             (hidden_size, hidden_size),
             (hidden_size, 1)]
    params = {}
    for idx, (fan_in, fan_out) in enumerate(sizes, start=1):
        key, kw, kb = jax.random.split(key, 3)
        bound = 1.0 / jnp.sqrt(jnp.float32(fan_in))
        params[f"w{idx}"] = jax.random.uniform(
            kw, (fan_in, fan_out), jnp.float32, -bound, bound)
        params[f"b{idx}"] = jax.random.uniform(
            kb, (1, fan_out), jnp.float32, -bound, bound)
    return params


if __name__ == "__main__":
    INPUT_SIZE = 32
    HIDDEN_SIZE = 32
    BATCH = 256          # auto-tiles to 2 x 128 -> exercises grid + 2-TC sharding

    key = jax.random.PRNGKey(0)
    key, kx = jax.random.split(key)
    x = jax.random.normal(kx, (BATCH, INPUT_SIZE), dtype=jnp.float32)
    params = init_params(key, INPUT_SIZE, HIDDEN_SIZE)

    prepped = prepare_params(params)             # one-time, out of the call path
    y = neural_network_forward(x, prepped, seed=1234)
    y = jax.block_until_ready(y)

    assert y.shape == (BATCH, 1)
    assert bool(jnp.all((y >= 0.0) & (y <= 1.0)))
    print("KERNEL_OK")
</pallas_src>

<mosaic_0001>
module attributes {stable_mosaic.version = 11 : i64} {
  func.func @_mlp_kernel(%arg0: i32, %arg1: memref<1xi32, #tpu.memory_space<smem>>, %arg2: memref<128x32xbf16, #tpu.memory_space<vmem>>, %arg3: memref<32x128xbf16, #tpu.memory_space<vmem>>, %arg4: memref<1x128xf32, #tpu.memory_space<vmem>>, %arg5: memref<128x128xbf16, #tpu.memory_space<vmem>>, %arg6: memref<1x128xf32, #tpu.memory_space<vmem>>, %arg7: memref<128x128xbf16, #tpu.memory_space<vmem>>, %arg8: memref<1x128xf32, #tpu.memory_space<vmem>>, %arg9: memref<128x128xbf16, #tpu.memory_space<vmem>>, %arg10: memref<1x128xf32, #tpu.memory_space<vmem>>, %arg11: memref<128x128xbf16, #tpu.memory_space<vmem>>, %arg12: memref<1x128xf32, #tpu.memory_space<vmem>>, %arg13: memref<128x1xf32, #tpu.memory_space<vmem>>) attributes {dimension_semantics = [#tpu.dimension_semantics<parallel>], iteration_bounds = array<i64: 2>, scalar_prefetch = 1 : i64, scratch_operands = 0 : i64, tpu.core_type = #tpu.core_type<tc>, window_params = [{transform_indices = @transform_0, window_bounds = array<i64: 128, 32>}, {pipeline_mode = #tpu.pipeline_mode<synchronous>, transform_indices = @transform_1, window_bounds = array<i64: 32, 128>}, {pipeline_mode = #tpu.pipeline_mode<synchronous>, transform_indices = @transform_2, window_bounds = array<i64: 1, 128>}, {pipeline_mode = #tpu.pipeline_mode<synchronous>, transform_indices = @transform_3, window_bounds = array<i64: 128, 128>}, {pipeline_mode = #tpu.pipeline_mode<synchronous>, transform_indices = @transform_4, window_bounds = array<i64: 1, 128>}, {pipeline_mode = #tpu.pipeline_mode<synchronous>, transform_indices = @transform_5, window_bounds = array<i64: 128, 128>}, {pipeline_mode = #tpu.pipeline_mode<synchronous>, transform_indices = @transform_6, window_bounds = array<i64: 1, 128>}, {pipeline_mode = #tpu.pipeline_mode<synchronous>, transform_indices = @transform_7, window_bounds = array<i64: 128, 128>}, {pipeline_mode = #tpu.pipeline_mode<synchronous>, transform_indices = @transform_8, window_bounds = array<i64: 1, 128>}, {pipeline_mode = #tpu.pipeline_mode<synchronous>, transform_indices = @transform_9, window_bounds = array<i64: 128, 128>}, {pipeline_mode = #tpu.pipeline_mode<synchronous>, transform_indices = @transform_10, window_bounds = array<i64: 1, 128>}, {transform_indices = @transform_11, window_bounds = array<i64: 128, 1>}]} {
    %c128_i32 = arith.constant 128 : i32
    %0 = arith.muli %arg0, %c128_i32 : i32
    %c0 = arith.constant 0 : index
    %1 = memref.load %arg1[%c0] : memref<1xi32, #tpu.memory_space<smem>>
    %2 = tpu.iota {dimensions = array<i32: 0>} : vector<128x128xi32>
    %3 = vector.broadcast %0 : i32 to vector<128x128xi32>
    %4 = arith.addi %2, %3 : vector<128x128xi32>
    %5 = tpu.iota {dimensions = array<i32: 1>} : vector<128x128xi32>
    %c128_i32_0 = arith.constant 128 : i32
    %6 = vector.broadcast %c128_i32_0 : i32 to vector<128x128xi32>
    %7 = arith.muli %4, %6 : vector<128x128xi32>
    %8 = arith.addi %7, %5 : vector<128x128xi32>
    %9 = vector.broadcast %1 : i32 to vector<128x128xi32>
    %10 = arith.xori %8, %9 : vector<128x128xi32>
    %c16_i32 = arith.constant 16 : i32
    %11 = vector.broadcast %c16_i32 : i32 to vector<128x128xi32>
    %12 = arith.shrsi %10, %11 : vector<128x128xi32>
    %c65535_i32 = arith.constant 65535 : i32
    %13 = vector.broadcast %c65535_i32 : i32 to vector<128x128xi32>
    %14 = arith.andi %12, %13 : vector<128x128xi32>
    %15 = arith.xori %10, %14 : vector<128x128xi32>
    %c-2048144789_i32 = arith.constant -2048144789 : i32
    %16 = vector.broadcast %c-2048144789_i32 : i32 to vector<128x128xi32>
    %17 = arith.muli %15, %16 : vector<128x128xi32>
    %c13_i32 = arith.constant 13 : i32
    %18 = vector.broadcast %c13_i32 : i32 to vector<128x128xi32>
    %19 = arith.shrsi %17, %18 : vector<128x128xi32>
    %c524287_i32 = arith.constant 524287 : i32
    %20 = vector.broadcast %c524287_i32 : i32 to vector<128x128xi32>
    %21 = arith.andi %19, %20 : vector<128x128xi32>
    %22 = arith.xori %17, %21 : vector<128x128xi32>
    %c-1028477387_i32 = arith.constant -1028477387 : i32
    %23 = vector.broadcast %c-1028477387_i32 : i32 to vector<128x128xi32>
    %24 = arith.muli %22, %23 : vector<128x128xi32>
    %c16_i32_1 = arith.constant 16 : i32
    %25 = vector.broadcast %c16_i32_1 : i32 to vector<128x128xi32>
    %26 = arith.shrsi %24, %25 : vector<128x128xi32>
    %c65535_i32_2 = arith.constant 65535 : i32
    %27 = vector.broadcast %c65535_i32_2 : i32 to vector<128x128xi32>
    %28 = arith.andi %26, %27 : vector<128x128xi32>
    %29 = arith.xori %24, %28 : vector<128x128xi32>
    %c0_3 = arith.constant 0 : index
    %c0_4 = arith.constant 0 : index
    %30 = vector.load %arg2[%c0_3, %c0_4] : memref<128x32xbf16, #tpu.memory_space<vmem>>, vector<128x32xbf16>
    %c0_5 = arith.constant 0 : index
    %c0_6 = arith.constant 0 : index
    %31 = vector.load %arg3[%c0_5, %c0_6] : memref<32x128xbf16, #tpu.memory_space<vmem>>, vector<32x128xbf16>
    %cst = arith.constant dense<0.000000e+00> : vector<128x128xf32>
    %32 = tpu.matmul %30, %31, %cst {dimension_numbers = #tpu.dot_dimension_numbers<[1], [0], [0], [1], [0, 0, 1, 1], [], []>} : vector<128x32xbf16>, vector<32x128xbf16>, vector<128x128xf32> -> vector<128x128xf32>
    %c0_7 = arith.constant 0 : index
    %c0_8 = arith.constant 0 : index
    %33 = vector.load %arg4[%c0_7, %c0_8] : memref<1x128xf32, #tpu.memory_space<vmem>>, vector<1x128xf32>
    %34 = vector.broadcast %33 : vector<1x128xf32> to vector<128x128xf32>
    %35 = arith.addf %32, %34 : vector<128x128xf32>
    %36 = arith.truncf %35 : vector<128x128xf32> to vector<128x128xbf16>
    %c0_i32 = arith.constant 0 : i32
    %37 = vector.broadcast %c0_i32 : i32 to vector<128x128xi32>
    %38 = arith.shrsi %29, %37 : vector<128x128xi32>
    %c1_i32 = arith.constant 1 : i32
    %39 = vector.broadcast %c1_i32 : i32 to vector<128x128xi32>
    %40 = arith.andi %38, %39 : vector<128x128xi32>
    %c0_i32_9 = arith.constant 0 : i32
    %41 = vector.broadcast %c0_i32_9 : i32 to vector<128x128xi32>
    %42 = arith.cmpi ne, %40, %41 : vector<128x128xi32>
    %cst_10 = arith.constant 0.000000e+00 : bf16
    %43 = vector.broadcast %cst_10 : bf16 to vector<128x128xbf16>
    %44 = arith.cmpf ogt, %36, %43 : vector<128x128xbf16>
    %45 = arith.andi %42, %44 : vector<128x128xi1>
    %cst_11 = arith.constant 0.000000e+00 : bf16
    %46 = vector.broadcast %cst_11 : bf16 to vector<128x128xbf16>
    %47 = arith.select %45, %36, %46 : vector<128x128xi1>, vector<128x128xbf16>
    %c0_12 = arith.constant 0 : index
    %c0_13 = arith.constant 0 : index
    %48 = vector.load %arg5[%c0_12, %c0_13] : memref<128x128xbf16, #tpu.memory_space<vmem>>, vector<128x128xbf16>
    %cst_14 = arith.constant dense<0.000000e+00> : vector<128x128xf32>
    %49 = tpu.matmul %47, %48, %cst_14 {dimension_numbers = #tpu.dot_dimension_numbers<[1], [0], [0], [1], [0, 0, 1, 1], [], []>} : vector<128x128xbf16>, vector<128x128xbf16>, vector<128x128xf32> -> vector<128x128xf32>
    %c0_15 = arith.constant 0 : index
    %c0_16 = arith.constant 0 : index
    %50 = vector.load %arg6[%c0_15, %c0_16] : memref<1x128xf32, #tpu.memory_space<vmem>>, vector<1x128xf32>
    %51 = vector.broadcast %50 : vector<1x128xf32> to vector<128x128xf32>
    %52 = arith.addf %49, %51 : vector<128x128xf32>
    %53 = arith.truncf %52 : vector<128x128xf32> to vector<128x128xbf16>
    %c1_i32_17 = arith.constant 1 : i32
    %54 = vector.broadcast %c1_i32_17 : i32 to vector<128x128xi32>
    %55 = arith.shrsi %29, %54 : vector<128x128xi32>
    %c1_i32_18 = arith.constant 1 : i32
    %56 = vector.broadcast %c1_i32_18 : i32 to vector<128x128xi32>
    %57 = arith.andi %55, %56 : vector<128x128xi32>
    %c0_i32_19 = arith.constant 0 : i32
    %58 = vector.broadcast %c0_i32_19 : i32 to vector<128x128xi32>
    %59 = arith.cmpi ne, %57, %58 : vector<128x128xi32>
    %cst_20 = arith.constant 0.000000e+00 : bf16
    %60 = vector.broadcast %cst_20 : bf16 to vector<128x128xbf16>
    %61 = arith.cmpf ogt, %53, %60 : vector<128x128xbf16>
    %62 = arith.andi %59, %61 : vector<128x128xi1>
    %cst_21 = arith.constant 0.000000e+00 : bf16
    %63 = vector.broadcast %cst_21 : bf16 to vector<128x128xbf16>
    %64 = arith.select %62, %53, %63 : vector<128x128xi1>, vector<128x128xbf16>
    %c0_22 = arith.constant 0 : index
    %c0_23 = arith.constant 0 : index
    %65 = vector.load %arg7[%c0_22, %c0_23] : memref<128x128xbf16, #tpu.memory_space<vmem>>, vector<128x128xbf16>
    %cst_24 = arith.constant dense<0.000000e+00> : vector<128x128xf32>
    %66 = tpu.matmul %64, %65, %cst_24 {dimension_numbers = #tpu.dot_dimension_numbers<[1], [0], [0], [1], [0, 0, 1, 1], [], []>} : vector<128x128xbf16>, vector<128x128xbf16>, vector<128x128xf32> -> vector<128x128xf32>
    %c0_25 = arith.constant 0 : index
    %c0_26 = arith.constant 0 : index
    %67 = vector.load %arg8[%c0_25, %c0_26] : memref<1x128xf32, #tpu.memory_space<vmem>>, vector<1x128xf32>
    %68 = vector.broadcast %67 : vector<1x128xf32> to vector<128x128xf32>
    %69 = arith.addf %66, %68 : vector<128x128xf32>
    %70 = arith.truncf %69 : vector<128x128xf32> to vector<128x128xbf16>
    %c2_i32 = arith.constant 2 : i32
    %71 = vector.broadcast %c2_i32 : i32 to vector<128x128xi32>
    %72 = arith.shrsi %29, %71 : vector<128x128xi32>
    %c1_i32_27 = arith.constant 1 : i32
    %73 = vector.broadcast %c1_i32_27 : i32 to vector<128x128xi32>
    %74 = arith.andi %72, %73 : vector<128x128xi32>
    %c0_i32_28 = arith.constant 0 : i32
    %75 = vector.broadcast %c0_i32_28 : i32 to vector<128x128xi32>
    %76 = arith.cmpi ne, %74, %75 : vector<128x128xi32>
    %cst_29 = arith.constant 0.000000e+00 : bf16
    %77 = vector.broadcast %cst_29 : bf16 to vector<128x128xbf16>
    %78 = arith.cmpf ogt, %70, %77 : vector<128x128xbf16>
    %79 = arith.andi %76, %78 : vector<128x128xi1>
    %cst_30 = arith.constant 0.000000e+00 : bf16
    %80 = vector.broadcast %cst_30 : bf16 to vector<128x128xbf16>
    %81 = arith.select %79, %70, %80 : vector<128x128xi1>, vector<128x128xbf16>
    %c0_31 = arith.constant 0 : index
    %c0_32 = arith.constant 0 : index
    %82 = vector.load %arg9[%c0_31, %c0_32] : memref<128x128xbf16, #tpu.memory_space<vmem>>, vector<128x128xbf16>
    %cst_33 = arith.constant dense<0.000000e+00> : vector<128x128xf32>
    %83 = tpu.matmul %81, %82, %cst_33 {dimension_numbers = #tpu.dot_dimension_numbers<[1], [0], [0], [1], [0, 0, 1, 1], [], []>} : vector<128x128xbf16>, vector<128x128xbf16>, vector<128x128xf32> -> vector<128x128xf32>
    %c0_34 = arith.constant 0 : index
    %c0_35 = arith.constant 0 : index
    %84 = vector.load %arg10[%c0_34, %c0_35] : memref<1x128xf32, #tpu.memory_space<vmem>>, vector<1x128xf32>
    %85 = vector.broadcast %84 : vector<1x128xf32> to vector<128x128xf32>
    %86 = arith.addf %83, %85 : vector<128x128xf32>
    %87 = arith.truncf %86 : vector<128x128xf32> to vector<128x128xbf16>
    %c3_i32 = arith.constant 3 : i32
    %88 = vector.broadcast %c3_i32 : i32 to vector<128x128xi32>
    %89 = arith.shrsi %29, %88 : vector<128x128xi32>
    %c1_i32_36 = arith.constant 1 : i32
    %90 = vector.broadcast %c1_i32_36 : i32 to vector<128x128xi32>
    %91 = arith.andi %89, %90 : vector<128x128xi32>
    %c0_i32_37 = arith.constant 0 : i32
    %92 = vector.broadcast %c0_i32_37 : i32 to vector<128x128xi32>
    %93 = arith.cmpi ne, %91, %92 : vector<128x128xi32>
    %cst_38 = arith.constant 0.000000e+00 : bf16
    %94 = vector.broadcast %cst_38 : bf16 to vector<128x128xbf16>
    %95 = arith.cmpf ogt, %87, %94 : vector<128x128xbf16>
    %96 = arith.andi %93, %95 : vector<128x128xi1>
    %cst_39 = arith.constant 0.000000e+00 : bf16
    %97 = vector.broadcast %cst_39 : bf16 to vector<128x128xbf16>
    %98 = arith.select %96, %87, %97 : vector<128x128xi1>, vector<128x128xbf16>
    %c0_40 = arith.constant 0 : index
    %c0_41 = arith.constant 0 : index
    %99 = vector.load %arg11[%c0_40, %c0_41] : memref<128x128xbf16, #tpu.memory_space<vmem>>, vector<128x128xbf16>
    %cst_42 = arith.constant dense<0.000000e+00> : vector<128x128xf32>
    %100 = tpu.matmul %98, %99, %cst_42 {dimension_numbers = #tpu.dot_dimension_numbers<[1], [0], [0], [1], [0, 0, 1, 1], [], []>} : vector<128x128xbf16>, vector<128x128xbf16>, vector<128x128xf32> -> vector<128x128xf32>
    %c0_43 = arith.constant 0 : index
    %c0_44 = arith.constant 0 : index
    %101 = vector.load %arg12[%c0_43, %c0_44] : memref<1x128xf32, #tpu.memory_space<vmem>>, vector<1x128xf32>
    %102 = vector.broadcast %101 : vector<1x128xf32> to vector<128x128xf32>
    %103 = arith.addf %100, %102 : vector<128x128xf32>
    %cst_45 = arith.constant dense<0.000000e+00> : vector<128xf32>
    %104 = vector.multi_reduction <add>, %103, %cst_45 [1] : vector<128x128xf32> to vector<128xf32>
    %105 = vector.shape_cast %104 : vector<128xf32> to vector<128x1xf32>
    %cst_46 = arith.constant 5.000000e-01 : f32
    %106 = vector.broadcast %cst_46 : f32 to vector<128x1xf32>
    %107 = arith.mulf %106, %105 : vector<128x1xf32>
    %108 = math.tanh %107 : vector<128x1xf32>
    %cst_47 = arith.constant 1.000000e+00 : f32
    %109 = vector.broadcast %cst_47 : f32 to vector<128x1xf32>
    %110 = arith.addf %108, %109 : vector<128x1xf32>
    %cst_48 = arith.constant 5.000000e-01 : f32
    %111 = vector.broadcast %cst_48 : f32 to vector<128x1xf32>
    %112 = arith.mulf %111, %110 : vector<128x1xf32>
    %c0_49 = arith.constant 0 : index
    %c0_50 = arith.constant 0 : index
    %113 = vector.load %arg13[%c0_49, %c0_50] : memref<128x1xf32, #tpu.memory_space<vmem>>, vector<128x1xf32>
    tpu.vector_store %arg13[%c0_49, %c0_50], %112 {strides = array<i32>} : memref<128x1xf32, #tpu.memory_space<vmem>>, vector<128x1xf32>,
    return
  }
  func.func @transform_0(%arg0: i32, %arg1: memref<1xi32, #tpu.memory_space<smem>>) -> (i32, i32) {
    %c0_i32 = arith.constant 0 : i32
    %c0_i32_0 = arith.constant 0 : i32
    return %arg0, %c0_i32 : i32, i32
  }
  func.func @transform_1(%arg0: i32, %arg1: memref<1xi32, #tpu.memory_space<smem>>) -> (i32, i32) {
    %c0_i32 = arith.constant 0 : i32
    %c0_i32_0 = arith.constant 0 : i32
    %c0_i32_1 = arith.constant 0 : i32
    return %c0_i32, %c0_i32_0 : i32, i32
  }
  func.func @transform_2(%arg0: i32, %arg1: memref<1xi32, #tpu.memory_space<smem>>) -> (i32, i32) {
    %c0_i32 = arith.constant 0 : i32
    %c0_i32_0 = arith.constant 0 : i32
    %c0_i32_1 = arith.constant 0 : i32
    return %c0_i32, %c0_i32_0 : i32, i32
  }
  func.func @transform_3(%arg0: i32, %arg1: memref<1xi32, #tpu.memory_space<smem>>) -> (i32, i32) {
    %c0_i32 = arith.constant 0 : i32
    %c0_i32_0 = arith.constant 0 : i32
    %c0_i32_1 = arith.constant 0 : i32
    return %c0_i32, %c0_i32_0 : i32, i32
  }
  func.func @transform_4(%arg0: i32, %arg1: memref<1xi32, #tpu.memory_space<smem>>) -> (i32, i32) {
    %c0_i32 = arith.constant 0 : i32
    %c0_i32_0 = arith.constant 0 : i32
    %c0_i32_1 = arith.constant 0 : i32
    return %c0_i32, %c0_i32_0 : i32, i32
  }
  func.func @transform_5(%arg0: i32, %arg1: memref<1xi32, #tpu.memory_space<smem>>) -> (i32, i32) {
    %c0_i32 = arith.constant 0 : i32
    %c0_i32_0 = arith.constant 0 : i32
    %c0_i32_1 = arith.constant 0 : i32
    return %c0_i32, %c0_i32_0 : i32, i32
  }
  func.func @transform_6(%arg0: i32, %arg1: memref<1xi32, #tpu.memory_space<smem>>) -> (i32, i32) {
    %c0_i32 = arith.constant 0 : i32
    %c0_i32_0 = arith.constant 0 : i32
    %c0_i32_1 = arith.constant 0 : i32
    return %c0_i32, %c0_i32_0 : i32, i32
  }
  func.func @transform_7(%arg0: i32, %arg1: memref<1xi32, #tpu.memory_space<smem>>) -> (i32, i32) {
    %c0_i32 = arith.constant 0 : i32
    %c0_i32_0 = arith.constant 0 : i32
    %c0_i32_1 = arith.constant 0 : i32
    return %c0_i32, %c0_i32_0 : i32, i32
  }
  func.func @transform_8(%arg0: i32, %arg1: memref<1xi32, #tpu.memory_space<smem>>) -> (i32, i32) {
    %c0_i32 = arith.constant 0 : i32
    %c0_i32_0 = arith.constant 0 : i32
    %c0_i32_1 = arith.constant 0 : i32
    return %c0_i32, %c0_i32_0 : i32, i32
  }
  func.func @transform_9(%arg0: i32, %arg1: memref<1xi32, #tpu.memory_space<smem>>) -> (i32, i32) {
    %c0_i32 = arith.constant 0 : i32
    %c0_i32_0 = arith.constant 0 : i32
    %c0_i32_1 = arith.constant 0 : i32
    return %c0_i32, %c0_i32_0 : i32, i32
  }
  func.func @transform_10(%arg0: i32, %arg1: memref<1xi32, #tpu.memory_space<smem>>) -> (i32, i32) {
    %c0_i32 = arith.constant 0 : i32
    %c0_i32_0 = arith.constant 0 : i32
    %c0_i32_1 = arith.constant 0 : i32
    return %c0_i32, %c0_i32_0 : i32, i32
  }
  func.func @transform_11(%arg0: i32, %arg1: memref<1xi32, #tpu.memory_space<smem>>) -> (i32, i32) {
    %c0_i32 = arith.constant 0 : i32
    %c0_i32_0 = arith.constant 0 : i32
    return %arg0, %c0_i32 : i32, i32
  }
}

</mosaic_0001>

<llo_original>
// kernel: tpu_custom_call.1
$region0: #{tpu_custom_call.1}
  #allocation0 [shape = 'u32[]', space=smem, size = 0x4, offset = 0x4, fixed_abs, tag = 'smem constant byte address 0x4 - core index']
  #allocation1 [shape = 'u32[144,128]{1,0:T(1,128)}', space=vmem, size = 0x12000, scoped, tag = 'internal scratch']
  #allocation2 [shape = 's32[1]{0}', space=sflag, size = 0x4, scoped, tag = 'scoped memory for tpu_custom_call.1']
  #allocation3 [shape = 's32[1]{0:T(128)S(6)}', space=smem, size = 0x200, scoped, tag = 'prefetched SMEM operand 0']
  %s0 = inlined_call_operand.<no memory space> [shape: s32[1], index: 0, kind: input, shape index: {}]
  %s1 = inlined_call_operand.vmem [shape: bf16[256,32], index: 1, kind: input, shape index: {}]
  %s2 = inlined_call_operand.hbm [shape: bf16[32,128], index: 2, kind: input, shape index: {}]
  %s3 = inlined_call_operand.vmem [shape: f32[1,128], index: 3, kind: input, shape index: {}]
  %s4 = inlined_call_operand.vmem [shape: bf16[128,128], index: 4, kind: input, shape index: {}]
  %s5 = inlined_call_operand.vmem [shape: f32[1,128], index: 5, kind: input, shape index: {}]
  %s6 = inlined_call_operand.vmem [shape: bf16[128,128], index: 6, kind: input, shape index: {}]
  %s7 = inlined_call_operand.hbm [shape: f32[1,128], index: 7, kind: input, shape index: {}]
  %s8 = inlined_call_operand.hbm [shape: bf16[128,128], index: 8, kind: input, shape index: {}]
  %s9 = inlined_call_operand.hbm [shape: f32[1,128], index: 9, kind: input, shape index: {}]
  %s10 = inlined_call_operand.vmem [shape: bf16[128,128], index: 10, kind: input, shape index: {}]
  %s11 = inlined_call_operand.vmem [shape: f32[1,128], index: 11, kind: input, shape index: {}]
  %s12 = inlined_call_operand.vmem [shape: f32[256,1], index: 12, kind: output, shape index: {}]
  %s13 = sld [smem:[#allocation0]]
  $region93: #{tpu_custom_call.1} parent=0
    _
  %s15 = ssub.s32 1, %s13
  %s16 = scalar_select 0, %s15, %s13
  %17 = sst [smem:[#allocation3]] %s0
  $region1: #{tpu_custom_call.1} parent=0
    #allocation4 [shape = 'u8[8192]{0}', space=vmem, size = 0x2000, scoped, tag = 'input window, operand 2, single buffered']
    #allocation5 [shape = 's32[2]{0}', space=sflag, size = 0x8, scoped, tag = 'scoped memory for tpu_custom_call.1']
    #allocation6 [shape = 'u8[512]{0}', space=vmem, size = 0x400, scoped, tag = 'input window, operand 7, single buffered']
    #allocation7 [shape = 's32[1]{0}', space=sflag, size = 0x4, scoped, tag = 'scoped memory for tpu_custom_call.1']
    #allocation8 [shape = 'u8[32768]{0}', space=vmem, size = 0x8000, scoped, tag = 'input window, operand 8, single buffered']
    #allocation9 [shape = 'u8[512]{0}', space=vmem, size = 0x400, scoped, tag = 'input window, operand 9, single buffered']
    #allocation10 [shape = 's32[1]{0}', space=sflag, size = 0x4, scoped, tag = 'scoped memory for tpu_custom_call.1']
    %18 = vsyncpa [#allocation5], 0
    %19 = vsyncpa [#allocation7], 0
    %20 = vsyncpa [#allocation10], 0
    loop: start=0, step=1, limit=4
    $region2: #{tpu_custom_call.1} parent=1 // loop_pre_header
      _
    $region3: #{tpu_custom_call.1} parent=1 // loop_header
      %s22 = sphi 0, %s26
      %p23 = scmp.ge.s32.totalorder %s22, 4
      %s32 = sphi 0, %s34
      %s35 = sphi 0, %s32
      %s36 = sphi 0, %s35
      %s52 = sphi 0, %s36
      %s56 = sphi 0, %s56
      %s58 = sphi 0, %s56
      %s59 = sphi 0, %s58
      %s73 = sphi 0, %s59
      %s77 = sphi 0, %s77
      %s79 = sphi 0, %s77
      %s80 = sphi 0, %s79
      %s94 = sphi 0, %s80
      %s98 = sphi 0, %s98
      %s100 = sphi 0, %s98
      %s101 = sphi 0, %s100
      %s115 = sphi 0, %s101
      %s119 = sphi 0, %s119
      %s121 = sphi 0, %s119
      %s122 = sphi 0, %s121
      %s136 = sphi 0, %s122
      %s140 = sphi 0, %s140
      %s142 = sphi 0, %s140
      %s143 = sphi 0, %s142
      %s157 = sphi 0, %s143
      %s161 = sphi 0, %s161
      %s163 = sphi 0, %s161
      %s164 = sphi 0, %s163
      %s178 = sphi 0, %s164
      %s182 = sphi 0, %s182
      %s184 = sphi 0, %s182
      %s185 = sphi 0, %s184
      %s199 = sphi 0, %s185
      %s203 = sphi 0, %s203
      %s205 = sphi 0, %s203
      %s206 = sphi 0, %s205
      %s220 = sphi 0, %s206
      %s224 = sphi 0, %s224
      %s226 = sphi 0, %s224
      %s227 = sphi 0, %s226
      %s241 = sphi 0, %s227
      %s245 = sphi 0, %s245
      %s247 = sphi 0, %s245
      %s248 = sphi 0, %s247
      %s262 = sphi 0, %s248
      %s268 = sphi 0, %s270
      %s271 = sphi 0, %s268
      %s272 = sphi 0, %s271
      %s288 = sphi 0, %s272
    $region4: #{tpu_custom_call.1} parent=1 // loop_header_branch
      %25 = sbr.rel (%p23) target = $region8
    $region5: #{tpu_custom_call.1} parent=1 // loop_body
      %s27 = ssub.s32 %s22, 1
      %s28 = ssub.s32 %s22, 2
      %s29 = sadd.s32 %s22, 1
      %s30 = ssub.s32 %s22, %s29
      %p31 = scmp.eq.s32.totalorder %s30, 0
      %s33 = sadd.s32 %s32, 1
      %s34 = scalar_select %p31, %s32, %s33
      %p37 = pneg %p31
      %p38 = scmp.eq.s32.totalorder %s22, 1
      %p39 = por %p37, %p38
      %p40 = scmp.ne.s32.totalorder %s32, %s35
      %p41 = scmp.eq.s32.totalorder %s22, 0
      %p42 = por %p40, %p41
      %p43 = scmp.ne.s32.totalorder %s32, %s35
      %p44 = scmp.eq.s32.totalorder %s27, 1
      %p45 = por %p43, %p44
      %p46 = scmp.ne.s32.totalorder %s35, %s36
      %p47 = scmp.eq.s32.totalorder %s27, 0
      %p48 = por %p46, %p47
      %p49 = scmp.ne.s32.totalorder %s35, %s36
      %p50 = scmp.eq.s32.totalorder %s28, 1
      %p51 = por %p49, %p50
      %p53 = scmp.ne.s32.totalorder %s36, %s52
      %p54 = scmp.eq.s32.totalorder %s28, 0
      %p55 = por %p53, %p54
      %s57 = sadd.s32 %s56, 1
      %p60 = scmp.eq.s32.totalorder %s22, 1
      %p61 = scmp.ne.s32.totalorder %s56, %s58
      %p62 = scmp.eq.s32.totalorder %s22, 0
      %p63 = por %p61, %p62
      %p64 = scmp.ne.s32.totalorder %s56, %s58
      %p65 = scmp.eq.s32.totalorder %s27, 1
      %p66 = por %p64, %p65
      %p67 = scmp.ne.s32.totalorder %s58, %s59
      %p68 = scmp.eq.s32.totalorder %s27, 0
      %p69 = por %p67, %p68
      %p70 = scmp.ne.s32.totalorder %s58, %s59
      %p71 = scmp.eq.s32.totalorder %s28, 1
      %p72 = por %p70, %p71
      %p74 = scmp.ne.s32.totalorder %s59, %s73
      %p75 = scmp.eq.s32.totalorder %s28, 0
      %p76 = por %p74, %p75
      %s78 = sadd.s32 %s77, 1
      %p81 = scmp.eq.s32.totalorder %s22, 1
      %p82 = scmp.ne.s32.totalorder %s77, %s79
      %p83 = scmp.eq.s32.totalorder %s22, 0
      %p84 = por %p82, %p83
      %p85 = scmp.ne.s32.totalorder %s77, %s79
      %p86 = scmp.eq.s32.totalorder %s27, 1
      %p87 = por %p85, %p86
      %p88 = scmp.ne.s32.totalorder %s79, %s80
      %p89 = scmp.eq.s32.totalorder %s27, 0
      %p90 = por %p88, %p89
      %p91 = scmp.ne.s32.totalorder %s79, %s80
      %p92 = scmp.eq.s32.totalorder %s28, 1
      %p93 = por %p91, %p92
      %p95 = scmp.ne.s32.totalorder %s80, %s94
      %p96 = scmp.eq.s32.totalorder %s28, 0
      %p97 = por %p95, %p96
      %s99 = sadd.s32 %s98, 1
      %p102 = scmp.eq.s32.totalorder %s22, 1
      %p103 = scmp.ne.s32.totalorder %s98, %s100
      %p104 = scmp.eq.s32.totalorder %s22, 0
      %p105 = por %p103, %p104
      %p106 = scmp.ne.s32.totalorder %s98, %s100
      %p107 = scmp.eq.s32.totalorder %s27, 1
      %p108 = por %p106, %p107
      %p109 = scmp.ne.s32.totalorder %s100, %s101
      %p110 = scmp.eq.s32.totalorder %s27, 0
      %p111 = por %p109, %p110
      %p112 = scmp.ne.s32.totalorder %s100, %s101
      %p113 = scmp.eq.s32.totalorder %s28, 1
      %p114 = por %p112, %p113
      %p116 = scmp.ne.s32.totalorder %s101, %s115
      %p117 = scmp.eq.s32.totalorder %s28, 0
      %p118 = por %p116, %p117
      %s120 = sadd.s32 %s119, 1
      %p123 = scmp.eq.s32.totalorder %s22, 1
      %p124 = scmp.ne.s32.totalorder %s119, %s121
      %p125 = scmp.eq.s32.totalorder %s22, 0
      %p126 = por %p124, %p125
      %p127 = scmp.ne.s32.totalorder %s119, %s121
      %p128 = scmp.eq.s32.totalorder %s27, 1
      %p129 = por %p127, %p128
      %p130 = scmp.ne.s32.totalorder %s121, %s122
      %p131 = scmp.eq.s32.totalorder %s27, 0
      %p132 = por %p130, %p131
      %p133 = scmp.ne.s32.totalorder %s121, %s122
      %p134 = scmp.eq.s32.totalorder %s28, 1
      %p135 = por %p133, %p134
      %p137 = scmp.ne.s32.totalorder %s122, %s136
      %p138 = scmp.eq.s32.totalorder %s28, 0
      %p139 = por %p137, %p138
      %s141 = sadd.s32 %s140, 1
      %p144 = scmp.eq.s32.totalorder %s22, 1
      %p145 = scmp.ne.s32.totalorder %s140, %s142
      %p146 = scmp.eq.s32.totalorder %s22, 0
      %p147 = por %p145, %p146
      %p148 = scmp.ne.s32.totalorder %s140, %s142
      %p149 = scmp.eq.s32.totalorder %s27, 1
      %p150 = por %p148, %p149
      %p151 = scmp.ne.s32.totalorder %s142, %s143
      %p152 = scmp.eq.s32.totalorder %s27, 0
      %p153 = por %p151, %p152
      %p154 = scmp.ne.s32.totalorder %s142, %s143
      %p155 = scmp.eq.s32.totalorder %s28, 1
      %p156 = por %p154, %p155
      %p158 = scmp.ne.s32.totalorder %s143, %s157
      %p159 = scmp.eq.s32.totalorder %s28, 0
      %p160 = por %p158, %p159
      %s162 = sadd.s32 %s161, 1
      %p165 = scmp.eq.s32.totalorder %s22, 1
      %p166 = scmp.ne.s32.totalorder %s161, %s163
      %p167 = scmp.eq.s32.totalorder %s22, 0
      %p168 = por %p166, %p167
      %p169 = scmp.ne.s32.totalorder %s161, %s163
      %p170 = scmp.eq.s32.totalorder %s27, 1
      %p171 = por %p169, %p170
      %p172 = scmp.ne.s32.totalorder %s163, %s164
      %p173 = scmp.eq.s32.totalorder %s27, 0
      %p174 = por %p172, %p173
      %p175 = scmp.ne.s32.totalorder %s163, %s164
      %p176 = scmp.eq.s32.totalorder %s28, 1
      %p177 = por %p175, %p176
      %p179 = scmp.ne.s32.totalorder %s164, %s178
      %p180 = scmp.eq.s32.totalorder %s28, 0
      %p181 = por %p179, %p180
      %s183 = sadd.s32 %s182, 1
      %p186 = scmp.eq.s32.totalorder %s22, 1
      %p187 = scmp.ne.s32.totalorder %s182, %s184
      %p188 = scmp.eq.s32.totalorder %s22, 0
      %p189 = por %p187, %p188
      %p190 = scmp.ne.s32.totalorder %s182, %s184
      %p191 = scmp.eq.s32.totalorder %s27, 1
      %p192 = por %p190, %p191
      %p193 = scmp.ne.s32.totalorder %s184, %s185
      %p194 = scmp.eq.s32.totalorder %s27, 0
      %p195 = por %p193, %p194
      %p196 = scmp.ne.s32.totalorder %s184, %s185
      %p197 = scmp.eq.s32.totalorder %s28, 1
      %p198 = por %p196, %p197
      %p200 = scmp.ne.s32.totalorder %s185, %s199
      %p201 = scmp.eq.s32.totalorder %s28, 0
      %p202 = por %p200, %p201
      %s204 = sadd.s32 %s203, 1
      %p207 = scmp.eq.s32.totalorder %s22, 1
      %p208 = scmp.ne.s32.totalorder %s203, %s205
      %p209 = scmp.eq.s32.totalorder %s22, 0
      %p210 = por %p208, %p209
      %p211 = scmp.ne.s32.totalorder %s203, %s205
      %p212 = scmp.eq.s32.totalorder %s27, 1
      %p213 = por %p211, %p212
      %p214 = scmp.ne.s32.totalorder %s205, %s206
      %p215 = scmp.eq.s32.totalorder %s27, 0
      %p216 = por %p214, %p215
      %p217 = scmp.ne.s32.totalorder %s205, %s206
      %p218 = scmp.eq.s32.totalorder %s28, 1
      %p219 = por %p217, %p218
      %p221 = scmp.ne.s32.totalorder %s206, %s220
      %p222 = scmp.eq.s32.totalorder %s28, 0
      %p223 = por %p221, %p222
      %s225 = sadd.s32 %s224, 1
      %p228 = scmp.eq.s32.totalorder %s22, 1
      %p229 = scmp.ne.s32.totalorder %s224, %s226
      %p230 = scmp.eq.s32.totalorder %s22, 0
      %p231 = por %p229, %p230
      %p232 = scmp.ne.s32.totalorder %s224, %s226
      %p233 = scmp.eq.s32.totalorder %s27, 1
      %p234 = por %p232, %p233
      %p235 = scmp.ne.s32.totalorder %s226, %s227
      %p236 = scmp.eq.s32.totalorder %s27, 0
      %p237 = por %p235, %p236
      %p238 = scmp.ne.s32.totalorder %s226, %s227
      %p239 = scmp.eq.s32.totalorder %s28, 1
      %p240 = por %p238, %p239
      %p242 = scmp.ne.s32.totalorder %s227, %s241
      %p243 = scmp.eq.s32.totalorder %s28, 0
      %p244 = por %p242, %p243
      %s246 = sadd.s32 %s245, 1
      %p249 = scmp.eq.s32.totalorder %s22, 1
      %p250 = scmp.ne.s32.totalorder %s245, %s247
      %p251 = scmp.eq.s32.totalorder %s22, 0
      %p252 = por %p250, %p251
      %p253 = scmp.ne.s32.totalorder %s245, %s247
      %p254 = scmp.eq.s32.totalorder %s27, 1
      %p255 = por %p253, %p254
      %p256 = scmp.ne.s32.totalorder %s247, %s248
      %p257 = scmp.eq.s32.totalorder %s27, 0
      %p258 = por %p256, %p257
      %p259 = scmp.ne.s32.totalorder %s247, %s248
      %p260 = scmp.eq.s32.totalorder %s28, 1
      %p261 = por %p259, %p260
      %p263 = scmp.ne.s32.totalorder %s248, %s262
      %p264 = scmp.eq.s32.totalorder %s28, 0
      %p265 = por %p263, %p264
      %s266 = ssub.s32 %s22, %s29
      %p267 = scmp.eq.s32.totalorder %s266, 0
      %s269 = sadd.s32 %s268, 1
      %s270 = scalar_select %p267, %s268, %s269
      %p273 = pneg %p267
      %p274 = scmp.eq.s32.totalorder %s22, 1
      %p275 = por %p273, %p274
      %p276 = scmp.ne.s32.totalorder %s268, %s271
      %p277 = scmp.eq.s32.totalorder %s22, 0
      %p278 = por %p276, %p277
      %p279 = scmp.ne.s32.totalorder %s268, %s271
      %p280 = scmp.eq.s32.totalorder %s27, 1
      %p281 = por %p279, %p280
      %p282 = scmp.ne.s32.totalorder %s271, %s272
      %p283 = scmp.eq.s32.totalorder %s27, 0
      %p284 = por %p282, %p283
      %p285 = scmp.ne.s32.totalorder %s271, %s272
      %p286 = scmp.eq.s32.totalorder %s28, 1
      %p287 = por %p285, %p286
      %p289 = scmp.ne.s32.totalorder %s272, %s288
      %p290 = scmp.eq.s32.totalorder %s28, 0
      %p291 = por %p289, %p290
      %p292 = scmp.le.s32.totalorder 1, %s22
      %p293 = scmp.lt.s32.totalorder %s22, 3
      %p294 = pnand %p292, %p293
      %p295 = pneg %p294
      // Predicated region
      $region9: #{tpu_custom_call.1} parent=5 // pred_check
        _
      $region10: #{tpu_custom_call.1} parent=5 // pred_check_branch
        %297 = sbr.rel (%p294) target = $region12
      $region11: #{tpu_custom_call.1} parent=5 // pred_region
        %s298 = ssub.s32 %s22, 1
        // Predicated region
        $region13: #{tpu_custom_call.1} parent=11 // pred_check
          %p299 = pneg %p69
        $region14: #{tpu_custom_call.1} parent=11 // pred_check_branch
          %301 = sbr.rel (%p299) target = $region16
        $region15: #{tpu_custom_call.1} parent=11 // pred_region
          %s303 = ssub.s32 256, 256
          %304 = vsyncadd [#allocation5], %s303
          %s305 = sshll.u32 [#allocation4], 4
          %s306 = int_to_ptr.vmem [resolvable:$true] %s305
          %311 = dma.hbm_to_vmem [thread:$0]  %s2, 256, %s306, [#allocation5], 64, 64, 4
        $region16: #{tpu_custom_call.1} parent=11 // pred_fallthru
          _
        // Predicated region
        $region17: #{tpu_custom_call.1} parent=11 // pred_check
          %p312 = pneg %p90
        $region18: #{tpu_custom_call.1} parent=11 // pred_check_branch
          %314 = sbr.rel (%p312) target = $region20
        $region19: #{tpu_custom_call.1} parent=11 // pred_region
          _
        $region20: #{tpu_custom_call.1} parent=11 // pred_fallthru
          _
        // Predicated region
        $region21: #{tpu_custom_call.1} parent=11 // pred_check
          %p315 = pneg %p111
        $region22: #{tpu_custom_call.1} parent=11 // pred_check_branch
          %317 = sbr.rel (%p315) target = $region24
        $region23: #{tpu_custom_call.1} parent=11 // pred_region
          _
        $region24: #{tpu_custom_call.1} parent=11 // pred_fallthru
          _
        // Predicated region
        $region25: #{tpu_custom_call.1} parent=11 // pred_check
          %p318 = pneg %p132
        $region26: #{tpu_custom_call.1} parent=11 // pred_check_branch
          %320 = sbr.rel (%p318) target = $region28
        $region27: #{tpu_custom_call.1} parent=11 // pred_region
          _
        $region28: #{tpu_custom_call.1} parent=11 // pred_fallthru
          _
        // Predicated region
        $region29: #{tpu_custom_call.1} parent=11 // pred_check
          %p321 = pneg %p153
        $region30: #{tpu_custom_call.1} parent=11 // pred_check_branch
          %323 = sbr.rel (%p321) target = $region32
        $region31: #{tpu_custom_call.1} parent=11 // pred_region
          _
        $region32: #{tpu_custom_call.1} parent=11 // pred_fallthru
          _
        // Predicated region
        $region33: #{tpu_custom_call.1} parent=11 // pred_check
          %p324 = pneg %p174
        $region34: #{tpu_custom_call.1} parent=11 // pred_check_branch
          %326 = sbr.rel (%p324) target = $region36
        $region35: #{tpu_custom_call.1} parent=11 // pred_region
          %s328 = ssub.s32 16, 16
          %329 = vsyncadd [#allocation7], %s328
          %s331 = sshll.u32 [#allocation6], 4
          %s332 = int_to_ptr.vmem [resolvable:$true] %s331
          %334 = dma.hbm_to_vmem [thread:$0]  %s7, 16, %s332, [#allocation7]
        $region36: #{tpu_custom_call.1} parent=11 // pred_fallthru
          _
        // Predicated region
        $region37: #{tpu_custom_call.1} parent=11 // pred_check
          %p335 = pneg %p195
        $region38: #{tpu_custom_call.1} parent=11 // pred_check_branch
          %337 = sbr.rel (%p335) target = $region40
        $region39: #{tpu_custom_call.1} parent=11 // pred_region
          %s339 = ssub.s32 1024, 1024
          %340 = vsyncadd [#allocation7], %s339
          %s341 = sshll.u32 [#allocation8], 4
          %s342 = int_to_ptr.vmem [resolvable:$true] %s341
          %347 = dma.hbm_to_vmem [thread:$0]  %s8, 1024, %s342, [#allocation7], 64, 64, 4
        $region40: #{tpu_custom_call.1} parent=11 // pred_fallthru
          _
        // Predicated region
        $region41: #{tpu_custom_call.1} parent=11 // pred_check
          %p348 = pneg %p216
        $region42: #{tpu_custom_call.1} parent=11 // pred_check_branch
          %350 = sbr.rel (%p348) target = $region44
        $region43: #{tpu_custom_call.1} parent=11 // pred_region
          %s352 = ssub.s32 16, 16
          %353 = vsyncadd [#allocation10], %s352
          %s355 = sshll.u32 [#allocation9], 4
          %s356 = int_to_ptr.vmem [resolvable:$true] %s355
          %358 = dma.hbm_to_vmem [thread:$0]  %s9, 16, %s356, [#allocation10]
        $region44: #{tpu_custom_call.1} parent=11 // pred_fallthru
          _
        // Predicated region
        $region45: #{tpu_custom_call.1} parent=11 // pred_check
          %p359 = pneg %p237
        $region46: #{tpu_custom_call.1} parent=11 // pred_check_branch
          %361 = sbr.rel (%p359) target = $region48
        $region47: #{tpu_custom_call.1} parent=11 // pred_region
          _
        $region48: #{tpu_custom_call.1} parent=11 // pred_fallthru
          _
        // Predicated region
        $region49: #{tpu_custom_call.1} parent=11 // pred_check
          %p362 = pneg %p258
        $region50: #{tpu_custom_call.1} parent=11 // pred_check_branch
          %364 = sbr.rel (%p362) target = $region52
        $region51: #{tpu_custom_call.1} parent=11 // pred_region
          _
        $region52: #{tpu_custom_call.1} parent=11 // pred_fallthru
          _
      $region12: #{tpu_custom_call.1} parent=5 // pred_fallthru
        _
      %p365 = scmp.lt.s32.totalorder %s22, 2
      // Predicated region
      $region53: #{tpu_custom_call.1} parent=5 // pred_check
        %p366 = pneg %p365
      $region54: #{tpu_custom_call.1} parent=5 // pred_check_branch
        %368 = sbr.rel (%p366) target = $region56
      $region55: #{tpu_custom_call.1} parent=5 // pred_region
        // Predicated region
        $region57: #{tpu_custom_call.1} parent=55 // pred_check
          %p369 = pneg %p42
        $region58: #{tpu_custom_call.1} parent=55 // pred_check_branch
          %371 = sbr.rel (%p369) target = $region60
        $region59: #{tpu_custom_call.1} parent=55 // pred_region
          %s372 = smul.u32 16, %s22
          %p373 = scmp.lt.s32.totalorder %s372, 31
          %s374 = scalar_select %p373, %s372, 31
          %s375 = smul.addr %s374, 4
          %s376 = scalar_lea.vmem %s1, %s375
          %s377 = smul.u32 16, %s22
        $region60: #{tpu_custom_call.1} parent=55 // pred_fallthru
          _
      $region56: #{tpu_custom_call.1} parent=5 // pred_fallthru
        _
      %p378 = scmp.le.s32.totalorder 1, %s22
      %p379 = scmp.lt.s32.totalorder %s22, 3
      %p380 = pnand %p378, %p379
      %p381 = pneg %p380
      // Predicated region
      $region61: #{tpu_custom_call.1} parent=5 // pred_check
        _
      $region62: #{tpu_custom_call.1} parent=5 // pred_check_branch
        %383 = sbr.rel (%p380) target = $region64
      $region63: #{tpu_custom_call.1} parent=5 // pred_region
        %s384 = ssub.s32 %s22, 1
        // Predicated region
        $region65: #{tpu_custom_call.1} parent=63 // pred_check
          %p385 = pneg %p69
        $region66: #{tpu_custom_call.1} parent=63 // pred_check_branch
          %387 = sbr.rel (%p385) target = $region68
        $region67: #{tpu_custom_call.1} parent=63 // pred_region
          %388 = dma.done [#allocation5], 256
        $region68: #{tpu_custom_call.1} parent=63 // pred_fallthru
          _
        // Predicated region
        $region69: #{tpu_custom_call.1} parent=63 // pred_check
          %p389 = pneg %p174
        $region70: #{tpu_custom_call.1} parent=63 // pred_check_branch
          %391 = sbr.rel (%p389) target = $region72
        $region71: #{tpu_custom_call.1} parent=63 // pred_region
          %392 = dma.done [#allocation7], 16
        $region72: #{tpu_custom_call.1} parent=63 // pred_fallthru
          _
        // Predicated region
        $region73: #{tpu_custom_call.1} parent=63 // pred_check
          %p393 = pneg %p195
        $region74: #{tpu_custom_call.1} parent=63 // pred_check_branch
          %395 = sbr.rel (%p393) target = $region76
        $region75: #{tpu_custom_call.1} parent=63 // pred_region
          %396 = dma.done [#allocation7], 1024
        $region76: #{tpu_custom_call.1} parent=63 // pred_fallthru
          _
        // Predicated region
        $region77: #{tpu_custom_call.1} parent=63 // pred_check
          %p397 = pneg %p216
        $region78: #{tpu_custom_call.1} parent=63 // pred_check_branch
          %399 = sbr.rel (%p397) target = $region80
        $region79: #{tpu_custom_call.1} parent=63 // pred_region
          %400 = dma.done [#allocation10], 16
        $region80: #{tpu_custom_call.1} parent=63 // pred_fallthru
          _
        %s401 = smul.u32 16, %s27
        %p402 = scmp.lt.s32.totalorder %s401, 31
        %s403 = scalar_select %p402, %s401, 31
        %s404 = smul.addr %s403, 4
        %s405 = scalar_lea.vmem %s1, %s404
        %p406 = pneg %p48
        %p407 = pneg %p45
        %p408 = pneg %p69
        %p409 = pneg %p66
        %p410 = pneg %p90
        %p411 = pneg %p87
        %p412 = pneg %p111
        %p413 = pneg %p108
        %p414 = pneg %p132
        %p415 = pneg %p129
        %p416 = pneg %p153
        %p417 = pneg %p150
        %p418 = pneg %p174
        %p419 = pneg %p171
        %p420 = pneg %p195
        %p421 = pneg %p192
        %p422 = pneg %p216
        %p423 = pneg %p213
        %p424 = pneg %p237
        %p425 = pneg %p234
        %p426 = pneg %p258
        %p427 = pneg %p255
        %p428 = pneg %p284
        %p429 = pneg %p281
        %s430 = smul.u32 16, %s27
        %p431 = scmp.lt.s32.totalorder %s430, 31
        %s432 = scalar_select %p431, %s430, 31
        %s433 = smul.addr %s432, 8
        %s434 = scalar_lea.vmem %s12, %s433
        %s435 = smul.u32 16, %s27
        %p436 = scmp.lt.s32.totalorder %s435, 31
        %s437 = scalar_select %p436, %s435, 31
        %s438 = smul.addr %s437, 4
        %s439 = scalar_lea.vmem %s1, %s438
        %s440 = smul.u32 16, %s27
        %s441 = smul.u32 16, %s27
        %p442 = scmp.lt.s32.totalorder %s441, 31
        %s443 = scalar_select %p442, %s441, 31
        %s444 = smul.addr %s443, 8
        %s445 = scalar_lea.vmem %s12, %s444
        %s446 = smul.u32 16, %s27
        %s450 = smul.u32 %s27, 128
        %s451 = sld [smem:[#allocation3]]
        %v452 = vlaneseq
        %v453 = vshrl.u32 %v452, 7
        %v454 = vadd.s32 %v453, 8
        %v455 = vadd.s32 %v453, 16
        %v456 = vadd.s32 %v453, 24
        %v457 = vadd.s32 %v453, 32
        %v458 = vadd.s32 %v453, 40
        %v459 = vadd.s32 %v453, 48
        %v460 = vadd.s32 %v453, 56
        %v461 = vadd.s32 %v453, 64
        %v462 = vadd.s32 %v453, 72
        %v463 = vadd.s32 %v453, 80
        %v464 = vadd.s32 %v453, 88
        %v465 = vadd.s32 %v453, 96
        %v466 = vadd.s32 %v453, 104
        %v467 = vadd.s32 %v453, 112
        %v468 = vadd.s32 %v453, 120
        %v469 = vstv %s450
        %v470 = vadd.s32 %v453, %v469
        %v471 = vadd.s32 %v454, %v469
        %v472 = vadd.s32 %v455, %v469
        %v473 = vadd.s32 %v456, %v469
        %v474 = vadd.s32 %v457, %v469
        %v475 = vadd.s32 %v458, %v469
        %v476 = vadd.s32 %v459, %v469
        %v477 = vadd.s32 %v460, %v469
        %v478 = vadd.s32 %v461, %v469
        %v479 = vadd.s32 %v462, %v469
        %v480 = vadd.s32 %v463, %v469
        %v481 = vadd.s32 %v464, %v469
        %v482 = vadd.s32 %v465, %v469
        %v483 = vadd.s32 %v466, %v469
        %v484 = vadd.s32 %v467, %v469
        %v485 = vadd.s32 %v468, %v469
        %v486 = vlaneseq
        %v487 = vand.u32 %v486, 127
        %v488 = vmul.u32 %v470, 128
        %v489 = vmul.u32 %v471, 128
        %v490 = vmul.u32 %v472, 128
        %v491 = vmul.u32 %v473, 128
        %v492 = vmul.u32 %v474, 128
        %v493 = vmul.u32 %v475, 128
        %v494 = vmul.u32 %v476, 128
        %v495 = vmul.u32 %v477, 128
        %v496 = vmul.u32 %v478, 128
        %v497 = vmul.u32 %v479, 128
        %v498 = vmul.u32 %v480, 128
        %v499 = vmul.u32 %v481, 128
        %v500 = vmul.u32 %v482, 128
        %v501 = vmul.u32 %v483, 128
        %v502 = vmul.u32 %v484, 128
        %v503 = vmul.u32 %v485, 128
        %v504 = vadd.s32 %v488, %v487
        %v505 = vadd.s32 %v489, %v487
        %v506 = vadd.s32 %v490, %v487
        %v507 = vadd.s32 %v491, %v487
        %v508 = vadd.s32 %v492, %v487
        %v509 = vadd.s32 %v493, %v487
        %v510 = vadd.s32 %v494, %v487
        %v511 = vadd.s32 %v495, %v487
        %v512 = vadd.s32 %v496, %v487
        %v513 = vadd.s32 %v497, %v487
        %v514 = vadd.s32 %v498, %v487
        %v515 = vadd.s32 %v499, %v487
        %v516 = vadd.s32 %v500, %v487
        %v517 = vadd.s32 %v501, %v487
        %v518 = vadd.s32 %v502, %v487
        %v519 = vadd.s32 %v503, %v487
        %v520 = vstv %s451
        %v521 = vxor.u32 %v504, %v520
        %v522 = vxor.u32 %v505, %v520
        %v523 = vxor.u32 %v506, %v520
        %v524 = vxor.u32 %v507, %v520
        %v525 = vxor.u32 %v508, %v520
        %v526 = vxor.u32 %v509, %v520
        %v527 = vxor.u32 %v510, %v520
        %v528 = vxor.u32 %v511, %v520
        %v529 = vxor.u32 %v512, %v520
        %v530 = vxor.u32 %v513, %v520
        %v531 = vxor.u32 %v514, %v520
        %v532 = vxor.u32 %v515, %v520
        %v533 = vxor.u32 %v516, %v520
        %v534 = vxor.u32 %v517, %v520
        %v535 = vxor.u32 %v518, %v520
        %v536 = vxor.u32 %v519, %v520
        %v537 = vshra.s32 %v521, 16
        %v538 = vshra.s32 %v522, 16
        %v539 = vshra.s32 %v523, 16
        %v540 = vshra.s32 %v524, 16
        %v541 = vshra.s32 %v525, 16
        %v542 = vshra.s32 %v526, 16
        %v543 = vshra.s32 %v527, 16
        %v544 = vshra.s32 %v528, 16
        %v545 = vshra.s32 %v529, 16
        %v546 = vshra.s32 %v530, 16
        %v547 = vshra.s32 %v531, 16
        %v548 = vshra.s32 %v532, 16
        %v549 = vshra.s32 %v533, 16
        %v550 = vshra.s32 %v534, 16
        %v551 = vshra.s32 %v535, 16
        %v552 = vshra.s32 %v536, 16
        %v553 = vand.u32 %v537, 65535
        %v554 = vand.u32 %v538, 65535
        %v555 = vand.u32 %v539, 65535
        %v556 = vand.u32 %v540, 65535
        %v557 = vand.u32 %v541, 65535
        %v558 = vand.u32 %v542, 65535
        %v559 = vand.u32 %v543, 65535
        %v560 = vand.u32 %v544, 65535
        %v561 = vand.u32 %v545, 65535
        %v562 = vand.u32 %v546, 65535
        %v563 = vand.u32 %v547, 65535
        %v564 = vand.u32 %v548, 65535
        %v565 = vand.u32 %v549, 65535
        %v566 = vand.u32 %v550, 65535
        %v567 = vand.u32 %v551, 65535
        %v568 = vand.u32 %v552, 65535
        %v569 = vxor.u32 %v521, %v553
        %v570 = vxor.u32 %v522, %v554
        %v571 = vxor.u32 %v523, %v555
        %v572 = vxor.u32 %v524, %v556
        %v573 = vxor.u32 %v525, %v557
        %v574 = vxor.u32 %v526, %v558
        %v575 = vxor.u32 %v527, %v559
        %v576 = vxor.u32 %v528, %v560
        %v577 = vxor.u32 %v529, %v561
        %v578 = vxor.u32 %v530, %v562
        %v579 = vxor.u32 %v531, %v563
        %v580 = vxor.u32 %v532, %v564
        %v581 = vxor.u32 %v533, %v565
        %v582 = vxor.u32 %v534, %v566
        %v583 = vxor.u32 %v535, %v567
        %v584 = vxor.u32 %v536, %v568
        %v585 = vmul.u32 %v569, 2246822507
        %v586 = vmul.u32 %v570, 2246822507
        %v587 = vmul.u32 %v571, 2246822507
        %v588 = vmul.u32 %v572, 2246822507
        %v589 = vmul.u32 %v573, 2246822507
        %v590 = vmul.u32 %v574, 2246822507
        %v591 = vmul.u32 %v575, 2246822507
        %v592 = vmul.u32 %v576, 2246822507
        %v593 = vmul.u32 %v577, 2246822507
        %v594 = vmul.u32 %v578, 2246822507
        %v595 = vmul.u32 %v579, 2246822507
        %v596 = vmul.u32 %v580, 2246822507
        %v597 = vmul.u32 %v581, 2246822507
        %v598 = vmul.u32 %v582, 2246822507
        %v599 = vmul.u32 %v583, 2246822507
        %v600 = vmul.u32 %v584, 2246822507
        %v601 = vshra.s32 %v585, 13
        %v602 = vshra.s32 %v586, 13
        %v603 = vshra.s32 %v587, 13
        %v604 = vshra.s32 %v588, 13
        %v605 = vshra.s32 %v589, 13
        %v606 = vshra.s32 %v590, 13
        %v607 = vshra.s32 %v591, 13
        %v608 = vshra.s32 %v592, 13
        %v609 = vshra.s32 %v593, 13
        %v610 = vshra.s32 %v594, 13
        %v611 = vshra.s32 %v595, 13
        %v612 = vshra.s32 %v596, 13
        %v613 = vshra.s32 %v597, 13
        %v614 = vshra.s32 %v598, 13
        %v615 = vshra.s32 %v599, 13
        %v616 = vshra.s32 %v600, 13
        %v617 = vand.u32 %v601, 524287
        %v618 = vand.u32 %v602, 524287
        %v619 = vand.u32 %v603, 524287
        %v620 = vand.u32 %v604, 524287
        %v621 = vand.u32 %v605, 524287
        %v622 = vand.u32 %v606, 524287
        %v623 = vand.u32 %v607, 524287
        %v624 = vand.u32 %v608, 524287
        %v625 = vand.u32 %v609, 524287
        %v626 = vand.u32 %v610, 524287
        %v627 = vand.u32 %v611, 524287
        %v628 = vand.u32 %v612, 524287
        %v629 = vand.u32 %v613, 524287
        %v630 = vand.u32 %v614, 524287
        %v631 = vand.u32 %v615, 524287
        %v632 = vand.u32 %v616, 524287
        %v633 = vxor.u32 %v585, %v617
        %v634 = vxor.u32 %v586, %v618
        %v635 = vxor.u32 %v587, %v619
        %v636 = vxor.u32 %v588, %v620
        %v637 = vxor.u32 %v589, %v621
        %v638 = vxor.u32 %v590, %v622
        %v639 = vxor.u32 %v591, %v623
        %v640 = vxor.u32 %v592, %v624
        %v641 = vxor.u32 %v593, %v625
        %v642 = vxor.u32 %v594, %v626
        %v643 = vxor.u32 %v595, %v627
        %v644 = vxor.u32 %v596, %v628
        %v645 = vxor.u32 %v597, %v629
        %v646 = vxor.u32 %v598, %v630
        %v647 = vxor.u32 %v599, %v631
        %v648 = vxor.u32 %v600, %v632
        %v649 = vmul.u32 %v633, 3266489909
        %v650 = vmul.u32 %v634, 3266489909
        %v651 = vmul.u32 %v635, 3266489909
        %v652 = vmul.u32 %v636, 3266489909
        %v653 = vmul.u32 %v637, 3266489909
        %v654 = vmul.u32 %v638, 3266489909
        %v655 = vmul.u32 %v639, 3266489909
        %v656 = vmul.u32 %v640, 3266489909
        %v657 = vmul.u32 %v641, 3266489909
        %v658 = vmul.u32 %v642, 3266489909
        %v659 = vmul.u32 %v643, 3266489909
        %v660 = vmul.u32 %v644, 3266489909
        %v661 = vmul.u32 %v645, 3266489909
        %v662 = vmul.u32 %v646, 3266489909
        %v663 = vmul.u32 %v647, 3266489909
        %v664 = vmul.u32 %v648, 3266489909
        %v665 = vshra.s32 %v649, 16
        %v666 = vshra.s32 %v650, 16
        %v667 = vshra.s32 %v651, 16
        %v668 = vshra.s32 %v652, 16
        %v669 = vshra.s32 %v653, 16
        %v670 = vshra.s32 %v654, 16
        %v671 = vshra.s32 %v655, 16
        %v672 = vshra.s32 %v656, 16
        %v673 = vshra.s32 %v657, 16
        %v674 = vshra.s32 %v658, 16
        %v675 = vshra.s32 %v659, 16
        %v676 = vshra.s32 %v660, 16
        %v677 = vshra.s32 %v661, 16
        %v678 = vshra.s32 %v662, 16
        %v679 = vshra.s32 %v663, 16
        %v680 = vshra.s32 %v664, 16
        %v681 = vand.u32 %v665, 65535
        %v682 = vand.u32 %v666, 65535
        %v683 = vand.u32 %v667, 65535
        %v684 = vand.u32 %v668, 65535
        %v685 = vand.u32 %v669, 65535
        %v686 = vand.u32 %v670, 65535
        %v687 = vand.u32 %v671, 65535
        %v688 = vand.u32 %v672, 65535
        %v689 = vand.u32 %v673, 65535
        %v690 = vand.u32 %v674, 65535
        %v691 = vand.u32 %v675, 65535
        %v692 = vand.u32 %v676, 65535
        %v693 = vand.u32 %v677, 65535
        %v694 = vand.u32 %v678, 65535
        %v695 = vand.u32 %v679, 65535
        %v696 = vand.u32 %v680, 65535
        %v697 = vxor.u32 %v649, %v681
        %v698 = vxor.u32 %v650, %v682
        %v699 = vxor.u32 %v651, %v683
        %v700 = vxor.u32 %v652, %v684
        %v701 = vxor.u32 %v653, %v685
        %v702 = vxor.u32 %v654, %v686
        %v703 = vxor.u32 %v655, %v687
        %v704 = vxor.u32 %v656, %v688
        %v705 = vxor.u32 %v657, %v689
        %v706 = vxor.u32 %v658, %v690
        %v707 = vxor.u32 %v659, %v691
        %v708 = vxor.u32 %v660, %v692
        %v709 = vxor.u32 %v661, %v693
        %v710 = vxor.u32 %v662, %v694
        %v711 = vxor.u32 %v663, %v695
        %v712 = vxor.u32 %v664, %v696
        %v713 = vld [vmem:[%s439] sm:$0xf]
        %v714 = vld [vmem:[%s439 + $0x4] sm:$0xf]
        %v715 = vld [vmem:[%s439 + $0x8] sm:$0xf]
        %v716 = vld [vmem:[%s439 + $0xc] sm:$0xf]
        %v717 = vld [vmem:[%s439 + $0x10] sm:$0xf]
        %v718 = vld [vmem:[%s439 + $0x14] sm:$0xf]
        %v719 = vld [vmem:[%s439 + $0x18] sm:$0xf]
        %v720 = vld [vmem:[%s439 + $0x1c] sm:$0xf]
        %v721 = vld [vmem:[%s439 + $0x20] sm:$0xf]
        %v722 = vld [vmem:[%s439 + $0x24] sm:$0xf]
        %v723 = vld [vmem:[%s439 + $0x28] sm:$0xf]
        %v724 = vld [vmem:[%s439 + $0x2c] sm:$0xf]
        %v725 = vld [vmem:[%s439 + $0x30] sm:$0xf]
        %v726 = vld [vmem:[%s439 + $0x34] sm:$0xf]
        %v727 = vld [vmem:[%s439 + $0x38] sm:$0xf]
        %v728 = vld [vmem:[%s439 + $0x3c] sm:$0xf]
        %v729 = vld [vmem:[#allocation4] sm:$0xf]
        %v730 = vld [vmem:[#allocation4 + $0x4] sm:$0xf]
        %v731 = vld [vmem:[#allocation4 + $0x8] sm:$0xf]
        %v732 = vld [vmem:[#allocation4 + $0xc] sm:$0xf]
        %v733 = vld [vmem:[%s3] sm:$0x1]
        %v735 = vlaneseq
        %v736 = vshrl.u32 %v735, 7
        %v737 = vsub.s32 0, %v736
        %v738 = vrot.slane %v733, %v737
        %v756 = vunpack.c.l.b16 %v713
        %v757 = vunpack.c.l.b16 %v714
        %v758 = vunpack.c.l.b16 %v715
        %v759 = vunpack.c.l.b16 %v716
        %v760 = vunpack.c.l.b16 %v717
        %v761 = vunpack.c.l.b16 %v718
        %v762 = vunpack.c.l.b16 %v719
        %v763 = vunpack.c.l.b16 %v720
        %v764 = vunpack.c.l.b16 %v721
        %v765 = vunpack.c.l.b16 %v722
        %v766 = vunpack.c.l.b16 %v723
        %v767 = vunpack.c.l.b16 %v724
        %v768 = vunpack.c.l.b16 %v725
        %v769 = vunpack.c.l.b16 %v726
        %v770 = vunpack.c.l.b16 %v727
        %v771 = vunpack.c.l.b16 %v728
        %v772 = vpack.c.b16 %v757, %v756
        %v773 = vpack.c.b16 %v759, %v758
        %v774 = vpack.c.b16 %v761, %v760
        %v775 = vpack.c.b16 %v763, %v762
        %v776 = vpack.c.b16 %v765, %v764
        %v777 = vpack.c.b16 %v767, %v766
        %v778 = vpack.c.b16 %v769, %v768
        %v779 = vpack.c.b16 %v771, %v770
        %v784 = vunpack.c.l.b16 %v729
        %v785 = vunpack.c.l.b16 %v730
        %v786 = vunpack.c.l.b16 %v731
        %v787 = vunpack.c.l.b16 %v732
        %v788 = vpack.c.b16 %v785, %v784
        %v789 = vpack.c.b16 %v787, %v786
        %vm792 = vcmask 261120
        %v794 = vsel %vm792, %v772, 0
        %v797 = vsel %vm792, %v773, 0
        %v800 = vsel %vm792, %v774, 0
        %v803 = vsel %vm792, %v775, 0
        %v806 = vsel %vm792, %v776, 0
        %v809 = vsel %vm792, %v777, 0
        %v812 = vsel %vm792, %v778, 0
        %v815 = vsel %vm792, %v779, 0
        %817 = vmatprep.subr.bf16.mxu0 0
        %818 = vmatpush1.bf16.msra.mxu0 %v788
        %819 = vmatprep.subr.bf16.mxu0 0
        %820 = vmatpush1.bf16.msra.mxu0 %v789
        %821 = vmatprep.subr.bf16.mxu0 0
        %822 = vmatpush1.bf16.msra.mxu0 0
        %823 = vmatprep.subr.bf16.mxu0 0
        %824 = vmatpush1.bf16.msra.mxu0 0
        %825 = vmatprep.subr.bf16.mxu0 0
        %826 = vmatpush1.bf16.msra.mxu0 0
        %827 = vmatprep.subr.bf16.mxu0 0
        %828 = vmatpush1.bf16.msra.mxu0 0
        %829 = vmatprep.subr.bf16.mxu0 0
        %830 = vmatpush1.bf16.msra.mxu0 0
        %831 = vmatprep.subr.bf16.mxu0 0
        %832 = vmatpush1.bf16.msra.mxu0 0
        %833 = vmatprep.subr.bf16.mxu0 0
        %834 = vmatpush1.bf16.msra.mxu0 0
        %835 = vmatprep.subr.bf16.mxu0 0
        %836 = vmatpush1.bf16.msra.mxu0 0
        %837 = vmatprep.subr.bf16.mxu0 0
        %838 = vmatpush1.bf16.msra.mxu0 0
        %839 = vmatprep.subr.bf16.mxu0 0
        %840 = vmatpush1.bf16.msra.mxu0 0
        %841 = vmatprep.subr.bf16.mxu0 0
        %842 = vmatpush1.bf16.msra.mxu0 0
        %843 = vmatprep.subr.bf16.mxu0 0
        %844 = vmatpush1.bf16.msra.mxu0 0
        %845 = vmatprep.subr.bf16.mxu0 0
        %846 = vmatpush1.bf16.msra.mxu0 0
        %847 = vmatprep.subr.bf16.mxu0 0
        %848 = vmatpush1.bf16.msra.mxu0 0
        %849 = vmatprep.mubr.bf16.mxu0 0
        %850 = vmatmul.mubr.bf16.gmra.mrb[0].mxu0 %v794
        %v851 = vpop.f32.mrb[0].mxu0
        %v852 = vadd.f32 %v738, %v851
        %v853 = vpop.f32.mrb[0].mxu0
        %v854 = vpop.f32.mrb[0].mxu0
        %v855 = vadd.f32 %v738, %v854
        %v856 = vpop.f32.mrb[0].mxu0
        %857 = vmatprep.mubr.bf16.mxu0 0
        %858 = vmatmul.mubr.bf16.gmra.mrb[0].mxu0 %v797
        %v859 = vpop.f32.mrb[0].mxu0
        %v860 = vadd.f32 %v738, %v859
        %v861 = vpop.f32.mrb[0].mxu0
        %v862 = vpop.f32.mrb[0].mxu0
        %v863 = vadd.f32 %v738, %v862
        %v864 = vpop.f32.mrb[0].mxu0
        %865 = vmatprep.mubr.bf16.mxu0 0
        %866 = vmatmul.mubr.bf16.gmra.mrb[0].mxu0 %v800
        %v867 = vpop.f32.mrb[0].mxu0
        %v868 = vadd.f32 %v738, %v867
        %v869 = vpop.f32.mrb[0].mxu0
        %v870 = vpop.f32.mrb[0].mxu0
        %v871 = vadd.f32 %v738, %v870
        %v872 = vpop.f32.mrb[0].mxu0
        %873 = vmatprep.mubr.bf16.mxu0 0
        %874 = vmatmul.mubr.bf16.gmra.mrb[0].mxu0 %v803
        %v875 = vpop.f32.mrb[0].mxu0
        %v876 = vadd.f32 %v738, %v875
        %v877 = vpop.f32.mrb[0].mxu0
        %v878 = vpop.f32.mrb[0].mxu0
        %v879 = vadd.f32 %v738, %v878
        %v880 = vpop.f32.mrb[0].mxu0
        %881 = vmatprep.mubr.bf16.mxu0 0
        %882 = vmatmul.mubr.bf16.gmra.mrb[0].mxu0 %v806
        %v883 = vpop.f32.mrb[0].mxu0
        %v884 = vadd.f32 %v738, %v883
        %v885 = vpop.f32.mrb[0].mxu0
        %v886 = vpop.f32.mrb[0].mxu0
        %v887 = vadd.f32 %v738, %v886
        %v888 = vpop.f32.mrb[0].mxu0
        %889 = vmatprep.mubr.bf16.mxu0 0
        %890 = vmatmul.mubr.bf16.gmra.mrb[0].mxu0 %v809
        %v891 = vpop.f32.mrb[0].mxu0
        %v892 = vadd.f32 %v738, %v891
        %v893 = vpop.f32.mrb[0].mxu0
        %v894 = vpop.f32.mrb[0].mxu0
        %v895 = vadd.f32 %v738, %v894
        %v896 = vpop.f32.mrb[0].mxu0
        %897 = vmatprep.mubr.bf16.mxu0 0
        %898 = vmatmul.mubr.bf16.gmra.mrb[0].mxu0 %v812
        %v899 = vpop.f32.mrb[0].mxu0
        %v900 = vadd.f32 %v738, %v899
        %v901 = vpop.f32.mrb[0].mxu0
        %v902 = vpop.f32.mrb[0].mxu0
        %v903 = vadd.f32 %v738, %v902
        %v904 = vpop.f32.mrb[0].mxu0
        %905 = vmatprep.mubr.bf16.mxu0 0
        %906 = vmatmul.mubr.bf16.gmra.mrb[0].mxu0 %v815
        %v907 = vpop.f32.mrb[0].mxu0
        %v908 = vadd.f32 %v738, %v907
        %v909 = vpop.f32.mrb[0].mxu0
        %v910 = vpop.f32.mrb[0].mxu0
        %v911 = vadd.f32 %v738, %v910
        %v912 = vpop.f32.mrb[0].mxu0
        %913 = vdwg.mxu0
        %v914 = vpack.c.bf16 %v855, %v852
        %v915 = vpack.c.bf16 %v863, %v860
        %v916 = vpack.c.bf16 %v871, %v868
        %v917 = vpack.c.bf16 %v879, %v876
        %v918 = vpack.c.bf16 %v887, %v884
        %v919 = vpack.c.bf16 %v895, %v892
        %v920 = vpack.c.bf16 %v903, %v900
        %v921 = vpack.c.bf16 %v911, %v908
        %v922 = vand.u32 %v697, 1
        %v923 = vand.u32 %v698, 1
        %v924 = vand.u32 %v699, 1
        %v925 = vand.u32 %v700, 1
        %v926 = vand.u32 %v701, 1
        %v927 = vand.u32 %v702, 1
        %v928 = vand.u32 %v703, 1
        %v929 = vand.u32 %v704, 1
        %v930 = vand.u32 %v705, 1
        %v931 = vand.u32 %v706, 1
        %v932 = vand.u32 %v707, 1
        %v933 = vand.u32 %v708, 1
        %v934 = vand.u32 %v709, 1
        %v935 = vand.u32 %v710, 1
        %v936 = vand.u32 %v711, 1
        %v937 = vand.u32 %v712, 1
        %vm938 = vcmp.ne.s32.totalorder %v922, 0
        %vm939 = vcmp.ne.s32.totalorder %v923, 0
        %vm940 = vcmp.ne.s32.totalorder %v924, 0
        %vm941 = vcmp.ne.s32.totalorder %v925, 0
        %vm942 = vcmp.ne.s32.totalorder %v926, 0
        %vm943 = vcmp.ne.s32.totalorder %v927, 0
        %vm944 = vcmp.ne.s32.totalorder %v928, 0
        %vm945 = vcmp.ne.s32.totalorder %v929, 0
        %vm946 = vcmp.ne.s32.totalorder %v930, 0
        %vm947 = vcmp.ne.s32.totalorder %v931, 0
        %vm948 = vcmp.ne.s32.totalorder %v932, 0
        %vm949 = vcmp.ne.s32.totalorder %v933, 0
        %vm950 = vcmp.ne.s32.totalorder %v934, 0
        %vm951 = vcmp.ne.s32.totalorder %v935, 0
        %vm952 = vcmp.ne.s32.totalorder %v936, 0
        %vm953 = vcmp.ne.s32.totalorder %v937, 0
        %vm954 = vcmp.gt.bf16.partialorder %v914, 0
        %vm955 = vcmp.gt.bf16.partialorder %v915, 0
        %vm956 = vcmp.gt.bf16.partialorder %v916, 0
        %vm957 = vcmp.gt.bf16.partialorder %v917, 0
        %vm958 = vcmp.gt.bf16.partialorder %v918, 0
        %vm959 = vcmp.gt.bf16.partialorder %v919, 0
        %vm960 = vcmp.gt.bf16.partialorder %v920, 0
        %vm961 = vcmp.gt.bf16.partialorder %v921, 0
        %v962 = vsel %vm954, 65537, 0
        %v963 = vsel %vm955, 65537, 0
        %v964 = vsel %vm956, 65537, 0
        %v965 = vsel %vm957, 65537, 0
        %v966 = vsel %vm958, 65537, 0
        %v967 = vsel %vm959, 65537, 0
        %v968 = vsel %vm960, 65537, 0
        %v969 = vsel %vm961, 65537, 0
        %v970 = vunpack.c.l.b16 %v962
        %v971 = vunpack.c.h.b16 %v962
        %v972 = vunpack.c.l.b16 %v963
        %v973 = vunpack.c.h.b16 %v963
        %v974 = vunpack.c.l.b16 %v964
        %v975 = vunpack.c.h.b16 %v964
        %v976 = vunpack.c.l.b16 %v965
        %v977 = vunpack.c.h.b16 %v965
        %v978 = vunpack.c.l.b16 %v966
        %v979 = vunpack.c.h.b16 %v966
        %v980 = vunpack.c.l.b16 %v967
        %v981 = vunpack.c.h.b16 %v967
        %v982 = vunpack.c.l.b16 %v968
        %v983 = vunpack.c.h.b16 %v968
        %v984 = vunpack.c.l.b16 %v969
        %v985 = vunpack.c.h.b16 %v969
        %v986 = vpack.c.b16 %v970, %v970
        %v987 = vpack.c.b16 %v971, %v971
        %v988 = vpack.c.b16 %v972, %v972
        %v989 = vpack.c.b16 %v973, %v973
        %v990 = vpack.c.b16 %v974, %v974
        %v991 = vpack.c.b16 %v975, %v975
        %v992 = vpack.c.b16 %v976, %v976
        %v993 = vpack.c.b16 %v977, %v977
        %v994 = vpack.c.b16 %v978, %v978
        %v995 = vpack.c.b16 %v979, %v979
        %v996 = vpack.c.b16 %v980, %v980
        %v997 = vpack.c.b16 %v981, %v981
        %v998 = vpack.c.b16 %v982, %v982
        %v999 = vpack.c.b16 %v983, %v983
        %v1000 = vpack.c.b16 %v984, %v984
        %v1001 = vpack.c.b16 %v985, %v985
        %vm1002 = vcmp.ne.s16.totalorder %v986, 0
        %vm1003 = vcmp.ne.s16.totalorder %v987, 0
        %vm1004 = vcmp.ne.s16.totalorder %v988, 0
        %vm1005 = vcmp.ne.s16.totalorder %v989, 0
        %vm1006 = vcmp.ne.s16.totalorder %v990, 0
        %vm1007 = vcmp.ne.s16.totalorder %v991, 0
        %vm1008 = vcmp.ne.s16.totalorder %v992, 0
        %vm1009 = vcmp.ne.s16.totalorder %v993, 0
        %vm1010 = vcmp.ne.s16.totalorder %v994, 0
        %vm1011 = vcmp.ne.s16.totalorder %v995, 0
        %vm1012 = vcmp.ne.s16.totalorder %v996, 0
        %vm1013 = vcmp.ne.s16.totalorder %v997, 0
        %vm1014 = vcmp.ne.s16.totalorder %v998, 0
        %vm1015 = vcmp.ne.s16.totalorder %v999, 0
        %vm1016 = vcmp.ne.s16.totalorder %v1000, 0
        %vm1017 = vcmp.ne.s16.totalorder %v1001, 0
        %v1018 = vsel %vm1002, 65537, 0
        %v1019 = vsel %vm1003, 65537, 0
        %v1020 = vsel %vm1004, 65537, 0
        %v1021 = vsel %vm1005, 65537, 0
        %v1022 = vsel %vm1006, 65537, 0
        %v1023 = vsel %vm1007, 65537, 0
        %v1024 = vsel %vm1008, 65537, 0
        %v1025 = vsel %vm1009, 65537, 0
        %v1026 = vsel %vm1010, 65537, 0
        %v1027 = vsel %vm1011, 65537, 0
        %v1028 = vsel %vm1012, 65537, 0
        %v1029 = vsel %vm1013, 65537, 0
        %v1030 = vsel %vm1014, 65537, 0
        %v1031 = vsel %vm1015, 65537, 0
        %v1032 = vsel %vm1016, 65537, 0
        %v1033 = vsel %vm1017, 65537, 0
        %v1034 = vunpack.c.l.b16 %v1018
        %v1035 = vunpack.c.l.b16 %v1019
        %v1036 = vunpack.c.l.b16 %v1020
        %v1037 = vunpack.c.l.b16 %v1021
        %v1038 = vunpack.c.l.b16 %v1022
        %v1039 = vunpack.c.l.b16 %v1023
        %v1040 = vunpack.c.l.b16 %v1024
        %v1041 = vunpack.c.l.b16 %v1025
        %v1042 = vunpack.c.l.b16 %v1026
        %v1043 = vunpack.c.l.b16 %v1027
        %v1044 = vunpack.c.l.b16 %v1028
        %v1045 = vunpack.c.l.b16 %v1029
        %v1046 = vunpack.c.l.b16 %v1030
        %v1047 = vunpack.c.l.b16 %v1031
        %v1048 = vunpack.c.l.b16 %v1032
        %v1049 = vunpack.c.l.b16 %v1033
        %vm1050 = vcmp.ne.s32.totalorder %v1034, 0
        %vm1051 = vcmp.ne.s32.totalorder %v1035, 0
        %vm1052 = vcmp.ne.s32.totalorder %v1036, 0
        %vm1053 = vcmp.ne.s32.totalorder %v1037, 0
        %vm1054 = vcmp.ne.s32.totalorder %v1038, 0
        %vm1055 = vcmp.ne.s32.totalorder %v1039, 0
        %vm1056 = vcmp.ne.s32.totalorder %v1040, 0
        %vm1057 = vcmp.ne.s32.totalorder %v1041, 0
        %vm1058 = vcmp.ne.s32.totalorder %v1042, 0
        %vm1059 = vcmp.ne.s32.totalorder %v1043, 0
        %vm1060 = vcmp.ne.s32.totalorder %v1044, 0
        %vm1061 = vcmp.ne.s32.totalorder %v1045, 0
        %vm1062 = vcmp.ne.s32.totalorder %v1046, 0
        %vm1063 = vcmp.ne.s32.totalorder %v1047, 0
        %vm1064 = vcmp.ne.s32.totalorder %v1048, 0
        %vm1065 = vcmp.ne.s32.totalorder %v1049, 0
        %vm1066 = vmand %vm938, %vm1050
        %vm1067 = vmand %vm939, %vm1051
        %vm1068 = vmand %vm940, %vm1052
        %vm1069 = vmand %vm941, %vm1053
        %vm1070 = vmand %vm942, %vm1054
        %vm1071 = vmand %vm943, %vm1055
        %vm1072 = vmand %vm944, %vm1056
        %vm1073 = vmand %vm945, %vm1057
        %vm1074 = vmand %vm946, %vm1058
        %vm1075 = vmand %vm947, %vm1059
        %vm1076 = vmand %vm948, %vm1060
        %vm1077 = vmand %vm949, %vm1061
        %vm1078 = vmand %vm950, %vm1062
        %vm1079 = vmand %vm951, %vm1063
        %vm1080 = vmand %vm952, %vm1064
        %vm1081 = vmand %vm953, %vm1065
        %vm1082 = vmpackc.low %vm1067, %vm1066
        %vm1083 = vmpackc.low %vm1069, %vm1068
        %vm1084 = vmpackc.low %vm1071, %vm1070
        %vm1085 = vmpackc.low %vm1073, %vm1072
        %vm1086 = vmpackc.low %vm1075, %vm1074
        %vm1087 = vmpackc.low %vm1077, %vm1076
        %vm1088 = vmpackc.low %vm1079, %vm1078
        %vm1089 = vmpackc.low %vm1081, %vm1080
        %v1090 = vsel %vm1082, %v914, 0
        %v1091 = vsel %vm1083, %v915, 0
        %v1092 = vsel %vm1084, %v916, 0
        %v1093 = vsel %vm1085, %v917, 0
        %v1094 = vsel %vm1086, %v918, 0
        %v1095 = vsel %vm1087, %v919, 0
        %v1096 = vsel %vm1088, %v920, 0
        %v1097 = vsel %vm1089, %v921, 0
        %v1098 = vld [vmem:[%s4] sm:$0xf]
        %v1099 = vld [vmem:[%s4 + $0x4] sm:$0xf]
        %v1100 = vld [vmem:[%s4 + $0x8] sm:$0xf]
        %v1101 = vld [vmem:[%s4 + $0xc] sm:$0xf]
        %v1102 = vld [vmem:[%s4 + $0x10] sm:$0xf]
        %v1103 = vld [vmem:[%s4 + $0x14] sm:$0xf]
        %v1104 = vld [vmem:[%s4 + $0x18] sm:$0xf]
        %v1105 = vld [vmem:[%s4 + $0x1c] sm:$0xf]
        %v1106 = vld [vmem:[%s4 + $0x20] sm:$0xf]
        %v1107 = vld [vmem:[%s4 + $0x24] sm:$0xf]
        %v1108 = vld [vmem:[%s4 + $0x28] sm:$0xf]
        %v1109 = vld [vmem:[%s4 + $0x2c] sm:$0xf]
        %v1110 = vld [vmem:[%s4 + $0x30] sm:$0xf]
        %v1111 = vld [vmem:[%s4 + $0x34] sm:$0xf]
        %v1112 = vld [vmem:[%s4 + $0x38] sm:$0xf]
        %v1113 = vld [vmem:[%s4 + $0x3c] sm:$0xf]
        %v1114 = vld [vmem:[%s5] sm:$0x1]
        %v1116 = vlaneseq
        %v1117 = vshrl.u32 %v1116, 7
        %v1118 = vsub.s32 0, %v1117
        %v1119 = vrot.slane %v1114, %v1118
        %v1137 = vunpack.c.l.b16 %v1098
        %v1138 = vunpack.c.l.b16 %v1099
        %v1139 = vunpack.c.l.b16 %v1100
        %v1140 = vunpack.c.l.b16 %v1101
        %v1141 = vunpack.c.l.b16 %v1102
        %v1142 = vunpack.c.l.b16 %v1103
        %v1143 = vunpack.c.l.b16 %v1104
        %v1144 = vunpack.c.l.b16 %v1105
        %v1145 = vunpack.c.l.b16 %v1106
        %v1146 = vunpack.c.l.b16 %v1107
        %v1147 = vunpack.c.l.b16 %v1108
        %v1148 = vunpack.c.l.b16 %v1109
        %v1149 = vunpack.c.l.b16 %v1110
        %v1150 = vunpack.c.l.b16 %v1111
        %v1151 = vunpack.c.l.b16 %v1112
        %v1152 = vunpack.c.l.b16 %v1113
        %v1153 = vpack.c.b16 %v1138, %v1137
        %v1154 = vpack.c.b16 %v1140, %v1139
        %v1155 = vpack.c.b16 %v1142, %v1141
        %v1156 = vpack.c.b16 %v1144, %v1143
        %v1157 = vpack.c.b16 %v1146, %v1145
        %v1158 = vpack.c.b16 %v1148, %v1147
        %v1159 = vpack.c.b16 %v1150, %v1149
        %v1160 = vpack.c.b16 %v1152, %v1151
        %1169 = vmatprep.subr.bf16.mxu0 0
        %1170 = vmatpush1.bf16.msra.mxu0 %v1153
        %1171 = vmatprep.subr.bf16.mxu0 0
        %1172 = vmatpush1.bf16.msra.mxu0 %v1154
        %1173 = vmatprep.subr.bf16.mxu0 0
        %1174 = vmatpush1.bf16.msra.mxu0 %v1155
        %1175 = vmatprep.subr.bf16.mxu0 0
        %1176 = vmatpush1.bf16.msra.mxu0 %v1156
        %1177 = vmatprep.subr.bf16.mxu0 0
        %1178 = vmatpush1.bf16.msra.mxu0 %v1157
        %1179 = vmatprep.subr.bf16.mxu0 0
        %1180 = vmatpush1.bf16.msra.mxu0 %v1158
        %1181 = vmatprep.subr.bf16.mxu0 0
        %1182 = vmatpush1.bf16.msra.mxu0 %v1159
        %1183 = vmatprep.subr.bf16.mxu0 0
        %1184 = vmatpush1.bf16.msra.mxu0 %v1160
        %1185 = vmatprep.subr.bf16.mxu0 0
        %1186 = vmatpush1.bf16.msra.mxu0 0
        %1187 = vmatprep.subr.bf16.mxu0 0
        %1188 = vmatpush1.bf16.msra.mxu0 0
        %1189 = vmatprep.subr.bf16.mxu0 0
        %1190 = vmatpush1.bf16.msra.mxu0 0
        %1191 = vmatprep.subr.bf16.mxu0 0
        %1192 = vmatpush1.bf16.msra.mxu0 0
        %1193 = vmatprep.subr.bf16.mxu0 0
        %1194 = vmatpush1.bf16.msra.mxu0 0
        %1195 = vmatprep.subr.bf16.mxu0 0
        %1196 = vmatpush1.bf16.msra.mxu0 0
        %1197 = vmatprep.subr.bf16.mxu0 0
        %1198 = vmatpush1.bf16.msra.mxu0 0
        %1199 = vmatprep.subr.bf16.mxu0 0
        %1200 = vmatpush1.bf16.msra.mxu0 0
        %1201 = vmatprep.mubr.bf16.mxu0 0
        %1202 = vmatmul.mubr.bf16.gmra.mrb[0].mxu0 %v1090
        %v1203 = vpop.f32.mrb[0].mxu0
        %v1204 = vadd.f32 %v1119, %v1203
        %v1205 = vpop.f32.mrb[0].mxu0
        %v1206 = vpop.f32.mrb[0].mxu0
        %v1207 = vadd.f32 %v1119, %v1206
        %v1208 = vpop.f32.mrb[0].mxu0
        %1209 = vmatprep.mubr.bf16.mxu0 0
        %1210 = vmatmul.mubr.bf16.gmra.mrb[0].mxu0 %v1091
        %v1211 = vpop.f32.mrb[0].mxu0
        %v1212 = vadd.f32 %v1119, %v1211
        %v1213 = vpop.f32.mrb[0].mxu0
        %v1214 = vpop.f32.mrb[0].mxu0
        %v1215 = vadd.f32 %v1119, %v1214
        %v1216 = vpop.f32.mrb[0].mxu0
        %1217 = vmatprep.mubr.bf16.mxu0 0
        %1218 = vmatmul.mubr.bf16.gmra.mrb[0].mxu0 %v1092
        %v1219 = vpop.f32.mrb[0].mxu0
        %v1220 = vadd.f32 %v1119, %v1219
        %v1221 = vpop.f32.mrb[0].mxu0
        %v1222 = vpop.f32.mrb[0].mxu0
        %v1223 = vadd.f32 %v1119, %v1222
        %v1224 = vpop.f32.mrb[0].mxu0
        %1225 = vmatprep.mubr.bf16.mxu0 0
        %1226 = vmatmul.mubr.bf16.gmra.mrb[0].mxu0 %v1093
        %v1227 = vpop.f32.mrb[0].mxu0
        %v1228 = vadd.f32 %v1119, %v1227
        %v1229 = vpop.f32.mrb[0].mxu0
        %v1230 = vpop.f32.mrb[0].mxu0
        %v1231 = vadd.f32 %v1119, %v1230
        %v1232 = vpop.f32.mrb[0].mxu0
        %1233 = vmatprep.mubr.bf16.mxu0 0
        %1234 = vmatmul.mubr.bf16.gmra.mrb[0].mxu0 %v1094
        %v1235 = vpop.f32.mrb[0].mxu0
        %v1236 = vadd.f32 %v1119, %v1235
        %v1237 = vpop.f32.mrb[0].mxu0
        %v1238 = vpop.f32.mrb[0].mxu0
        %v1239 = vadd.f32 %v1119, %v1238
        %v1240 = vpop.f32.mrb[0].mxu0
        %1241 = vmatprep.mubr.bf16.mxu0 0
        %1242 = vmatmul.mubr.bf16.gmra.mrb[0].mxu0 %v1095
        %v1243 = vpop.f32.mrb[0].mxu0
        %v1244 = vadd.f32 %v1119, %v1243
        %v1245 = vpop.f32.mrb[0].mxu0
        %v1246 = vpop.f32.mrb[0].mxu0
        %v1247 = vadd.f32 %v1119, %v1246
        %v1248 = vpop.f32.mrb[0].mxu0
        %1249 = vmatprep.mubr.bf16.mxu0 0
        %1250 = vmatmul.mubr.bf16.gmra.mrb[0].mxu0 %v1096
        %v1251 = vpop.f32.mrb[0].mxu0
        %v1252 = vadd.f32 %v1119, %v1251
        %v1253 = vpop.f32.mrb[0].mxu0
        %v1254 = vpop.f32.mrb[0].mxu0
        %v1255 = vadd.f32 %v1119, %v1254
        %v1256 = vpop.f32.mrb[0].mxu0
        %1257 = vmatprep.mubr.bf16.mxu0 0
        %1258 = vmatmul.mubr.bf16.gmra.mrb[0].mxu0 %v1097
        %v1259 = vpop.f32.mrb[0].mxu0
        %v1260 = vadd.f32 %v1119, %v1259
        %v1261 = vpop.f32.mrb[0].mxu0
        %v1262 = vpop.f32.mrb[0].mxu0
        %v1263 = vadd.f32 %v1119, %v1262
        %v1264 = vpop.f32.mrb[0].mxu0
        %1265 = vdwg.mxu0
        %v1266 = vpack.c.bf16 %v1207, %v1204
        %v1267 = vpack.c.bf16 %v1215, %v1212
        %v1268 = vpack.c.bf16 %v1223, %v1220
        %v1269 = vpack.c.bf16 %v1231, %v1228
        %v1270 = vpack.c.bf16 %v1239, %v1236
        %v1271 = vpack.c.bf16 %v1247, %v1244
        %v1272 = vpack.c.bf16 %v1255, %v1252
        %v1273 = vpack.c.bf16 %v1263, %v1260
        %v1274 = vshra.s32 %v697, 1
        %v1275 = vshra.s32 %v698, 1
        %v1276 = vshra.s32 %v699, 1
        %v1277 = vshra.s32 %v700, 1
        %v1278 = vshra.s32 %v701, 1
        %v1279 = vshra.s32 %v702, 1
        %v1280 = vshra.s32 %v703, 1
        %v1281 = vshra.s32 %v704, 1
        %v1282 = vshra.s32 %v705, 1
        %v1283 = vshra.s32 %v706, 1
        %v1284 = vshra.s32 %v707, 1
        %v1285 = vshra.s32 %v708, 1
        %v1286 = vshra.s32 %v709, 1
        %v1287 = vshra.s32 %v710, 1
        %v1288 = vshra.s32 %v711, 1
        %v1289 = vshra.s32 %v712, 1
        %v1290 = vand.u32 %v1274, 1
        %v1291 = vand.u32 %v1275, 1
        %v1292 = vand.u32 %v1276, 1
        %v1293 = vand.u32 %v1277, 1
        %v1294 = vand.u32 %v1278, 1
        %v1295 = vand.u32 %v1279, 1
        %v1296 = vand.u32 %v1280, 1
        %v1297 = vand.u32 %v1281, 1
        %v1298 = vand.u32 %v1282, 1
        %v1299 = vand.u32 %v1283, 1
        %v1300 = vand.u32 %v1284, 1
        %v1301 = vand.u32 %v1285, 1
        %v1302 = vand.u32 %v1286, 1
        %v1303 = vand.u32 %v1287, 1
        %v1304 = vand.u32 %v1288, 1
        %v1305 = vand.u32 %v1289, 1
        %vm1306 = vcmp.ne.s32.totalorder %v1290, 0
        %vm1307 = vcmp.ne.s32.totalorder %v1291, 0
        %vm1308 = vcmp.ne.s32.totalorder %v1292, 0
        %vm1309 = vcmp.ne.s32.totalorder %v1293, 0
        %vm1310 = vcmp.ne.s32.totalorder %v1294, 0
        %vm1311 = vcmp.ne.s32.totalorder %v1295, 0
        %vm1312 = vcmp.ne.s32.totalorder %v1296, 0
        %vm1313 = vcmp.ne.s32.totalorder %v1297, 0
        %vm1314 = vcmp.ne.s32.totalorder %v1298, 0
        %vm1315 = vcmp.ne.s32.totalorder %v1299, 0
        %vm1316 = vcmp.ne.s32.totalorder %v1300, 0
        %vm1317 = vcmp.ne.s32.totalorder %v1301, 0
        %vm1318 = vcmp.ne.s32.totalorder %v1302, 0
        %vm1319 = vcmp.ne.s32.totalorder %v1303, 0
        %vm1320 = vcmp.ne.s32.totalorder %v1304, 0
        %vm1321 = vcmp.ne.s32.totalorder %v1305, 0
        %vm1322 = vcmp.gt.bf16.partialorder %v1266, 0
        %vm1323 = vcmp.gt.bf16.partialorder %v1267, 0
        %vm1324 = vcmp.gt.bf16.partialorder %v1268, 0
        %vm1325 = vcmp.gt.bf16.partialorder %v1269, 0
        %vm1326 = vcmp.gt.bf16.partialorder %v1270, 0
        %vm1327 = vcmp.gt.bf16.partialorder %v1271, 0
        %vm1328 = vcmp.gt.bf16.partialorder %v1272, 0
        %vm1329 = vcmp.gt.bf16.partialorder %v1273, 0
        %v1330 = vsel %vm1322, 65537, 0
        %v1331 = vsel %vm1323, 65537, 0
        %v1332 = vsel %vm1324, 65537, 0
        %v1333 = vsel %vm1325, 65537, 0
        %v1334 = vsel %vm1326, 65537, 0
        %v1335 = vsel %vm1327, 65537, 0
        %v1336 = vsel %vm1328, 65537, 0
        %v1337 = vsel %vm1329, 65537, 0
        %v1338 = vunpack.c.l.b16 %v1330
        %v1339 = vunpack.c.h.b16 %v1330
        %v1340 = vunpack.c.l.b16 %v1331
        %v1341 = vunpack.c.h.b16 %v1331
        %v1342 = vunpack.c.l.b16 %v1332
        %v1343 = vunpack.c.h.b16 %v1332
        %v1344 = vunpack.c.l.b16 %v1333
        %v1345 = vunpack.c.h.b16 %v1333
        %v1346 = vunpack.c.l.b16 %v1334
        %v1347 = vunpack.c.h.b16 %v1334
        %v1348 = vunpack.c.l.b16 %v1335
        %v1349 = vunpack.c.h.b16 %v1335
        %v1350 = vunpack.c.l.b16 %v1336
        %v1351 = vunpack.c.h.b16 %v1336
        %v1352 = vunpack.c.l.b16 %v1337
        %v1353 = vunpack.c.h.b16 %v1337
        %v1354 = vpack.c.b16 %v1338, %v1338
        %v1355 = vpack.c.b16 %v1339, %v1339
        %v1356 = vpack.c.b16 %v1340, %v1340
        %v1357 = vpack.c.b16 %v1341, %v1341
        %v1358 = vpack.c.b16 %v1342, %v1342
        %v1359 = vpack.c.b16 %v1343, %v1343
        %v1360 = vpack.c.b16 %v1344, %v1344
        %v1361 = vpack.c.b16 %v1345, %v1345
        %v1362 = vpack.c.b16 %v1346, %v1346
        %v1363 = vpack.c.b16 %v1347, %v1347
        %v1364 = vpack.c.b16 %v1348, %v1348
        %v1365 = vpack.c.b16 %v1349, %v1349
        %v1366 = vpack.c.b16 %v1350, %v1350
        %v1367 = vpack.c.b16 %v1351, %v1351
        %v1368 = vpack.c.b16 %v1352, %v1352
        %v1369 = vpack.c.b16 %v1353, %v1353
        %vm1370 = vcmp.ne.s16.totalorder %v1354, 0
        %vm1371 = vcmp.ne.s16.totalorder %v1355, 0
        %vm1372 = vcmp.ne.s16.totalorder %v1356, 0
        %vm1373 = vcmp.ne.s16.totalorder %v1357, 0
        %vm1374 = vcmp.ne.s16.totalorder %v1358, 0
        %vm1375 = vcmp.ne.s16.totalorder %v1359, 0
        %vm1376 = vcmp.ne.s16.totalorder %v1360, 0
        %vm1377 = vcmp.ne.s16.totalorder %v1361, 0
        %vm1378 = vcmp.ne.s16.totalorder %v1362, 0
        %vm1379 = vcmp.ne.s16.totalorder %v1363, 0
        %vm1380 = vcmp.ne.s16.totalorder %v1364, 0
        %vm1381 = vcmp.ne.s16.totalorder %v1365, 0
        %vm1382 = vcmp.ne.s16.totalorder %v1366, 0
        %vm1383 = vcmp.ne.s16.totalorder %v1367, 0
        %vm1384 = vcmp.ne.s16.totalorder %v1368, 0
        %vm1385 = vcmp.ne.s16.totalorder %v1369, 0
        %v1386 = vsel %vm1370, 65537, 0
        %v1387 = vsel %vm1371, 65537, 0
        %v1388 = vsel %vm1372, 65537, 0
        %v1389 = vsel %vm1373, 65537, 0
        %v1390 = vsel %vm1374, 65537, 0
        %v1391 = vsel %vm1375, 65537, 0
        %v1392 = vsel %vm1376, 65537, 0
        %v1393 = vsel %vm1377, 65537, 0
        %v1394 = vsel %vm1378, 65537, 0
        %v1395 = vsel %vm1379, 65537, 0
        %v1396 = vsel %vm1380, 65537, 0
        %v1397 = vsel %vm1381, 65537, 0
        %v1398 = vsel %vm1382, 65537, 0
        %v1399 = vsel %vm1383, 65537, 0
        %v1400 = vsel %vm1384, 65537, 0
        %v1401 = vsel %vm1385, 65537, 0
        %v1402 = vunpack.c.l.b16 %v1386
        %v1403 = vunpack.c.l.b16 %v1387
        %v1404 = vunpack.c.l.b16 %v1388
        %v1405 = vunpack.c.l.b16 %v1389
        %v1406 = vunpack.c.l.b16 %v1390
        %v1407 = vunpack.c.l.b16 %v1391
        %v1408 = vunpack.c.l.b16 %v1392
        %v1409 = vunpack.c.l.b16 %v1393
        %v1410 = vunpack.c.l.b16 %v1394
        %v1411 = vunpack.c.l.b16 %v1395
        %v1412 = vunpack.c.l.b16 %v1396
        %v1413 = vunpack.c.l.b16 %v1397
        %v1414 = vunpack.c.l.b16 %v1398
        %v1415 = vunpack.c.l.b16 %v1399
        %v1416 = vunpack.c.l.b16 %v1400
        %v1417 = vunpack.c.l.b16 %v1401
        %vm1418 = vcmp.ne.s32.totalorder %v1402, 0
        %vm1419 = vcmp.ne.s32.totalorder %v1403, 0
        %vm1420 = vcmp.ne.s32.totalorder %v1404, 0
        %vm1421 = vcmp.ne.s32.totalorder %v1405, 0
        %vm1422 = vcmp.ne.s32.totalorder %v1406, 0
        %vm1423 = vcmp.ne.s32.totalorder %v1407, 0
        %vm1424 = vcmp.ne.s32.totalorder %v1408, 0
        %vm1425 = vcmp.ne.s32.totalorder %v1409, 0
        %vm1426 = vcmp.ne.s32.totalorder %v1410, 0
        %vm1427 = vcmp.ne.s32.totalorder %v1411, 0
        %vm1428 = vcmp.ne.s32.totalorder %v1412, 0
        %vm1429 = vcmp.ne.s32.totalorder %v1413, 0
        %vm1430 = vcmp.ne.s32.totalorder %v1414, 0
        %vm1431 = vcmp.ne.s32.totalorder %v1415, 0
        %vm1432 = vcmp.ne.s32.totalorder %v1416, 0
        %vm1433 = vcmp.ne.s32.totalorder %v1417, 0
        %vm1434 = vmand %vm1306, %vm1418
        %vm1435 = vmand %vm1307, %vm1419
        %vm1436 = vmand %vm1308, %vm1420
        %vm1437 = vmand %vm1309, %vm1421
        %vm1438 = vmand %vm1310, %vm1422
        %vm1439 = vmand %vm1311, %vm1423
        %vm1440 = vmand %vm1312, %vm1424
        %vm1441 = vmand %vm1313, %vm1425
        %vm1442 = vmand %vm1314, %vm1426
        %vm1443 = vmand %vm1315, %vm1427
        %vm1444 = vmand %vm1316, %vm1428
        %vm1445 = vmand %vm1317, %vm1429
        %vm1446 = vmand %vm1318, %vm1430
        %vm1447 = vmand %vm1319, %vm1431
        %vm1448 = vmand %vm1320, %vm1432
        %vm1449 = vmand %vm1321, %vm1433
        %vm1450 = vmpackc.low %vm1435, %vm1434
        %vm1451 = vmpackc.low %vm1437, %vm1436
        %vm1452 = vmpackc.low %vm1439, %vm1438
        %vm1453 = vmpackc.low %vm1441, %vm1440
        %vm1454 = vmpackc.low %vm1443, %vm1442
        %vm1455 = vmpackc.low %vm1445, %vm1444
        %vm1456 = vmpackc.low %vm1447, %vm1446
        %vm1457 = vmpackc.low %vm1449, %vm1448
        %v1458 = vsel %vm1450, %v1266, 0
        %v1459 = vsel %vm1451, %v1267, 0
        %v1460 = vsel %vm1452, %v1268, 0
        %v1461 = vsel %vm1453, %v1269, 0
        %v1462 = vsel %vm1454, %v1270, 0
        %v1463 = vsel %vm1455, %v1271, 0
        %v1464 = vsel %vm1456, %v1272, 0
        %v1465 = vsel %vm1457, %v1273, 0
        %v1466 = vld [vmem:[%s6] sm:$0xf]
        %v1467 = vld [vmem:[%s6 + $0x4] sm:$0xf]
        %v1468 = vld [vmem:[%s6 + $0x8] sm:$0xf]
        %v1469 = vld [vmem:[%s6 + $0xc] sm:$0xf]
        %v1470 = vld [vmem:[%s6 + $0x10] sm:$0xf]
        %v1471 = vld [vmem:[%s6 + $0x14] sm:$0xf]
        %v1472 = vld [vmem:[%s6 + $0x18] sm:$0xf]
        %v1473 = vld [vmem:[%s6 + $0x1c] sm:$0xf]
        %v1474 = vld [vmem:[%s6 + $0x20] sm:$0xf]
        %v1475 = vld [vmem:[%s6 + $0x24] sm:$0xf]
        %v1476 = vld [vmem:[%s6 + $0x28] sm:$0xf]
        %v1477 = vld [vmem:[%s6 + $0x2c] sm:$0xf]
        %v1478 = vld [vmem:[%s6 + $0x30] sm:$0xf]
        %v1479 = vld [vmem:[%s6 + $0x34] sm:$0xf]
        %v1480 = vld [vmem:[%s6 + $0x38] sm:$0xf]
        %v1481 = vld [vmem:[%s6 + $0x3c] sm:$0xf]
        %v1482 = vld [vmem:[#allocation6] sm:$0x1]
        %v1484 = vlaneseq
        %v1485 = vshrl.u32 %v1484, 7
        %v1486 = vsub.s32 0, %v1485
        %v1487 = vrot.slane %v1482, %v1486
        %v1505 = vunpack.c.l.b16 %v1466
        %v1506 = vunpack.c.l.b16 %v1467
        %v1507 = vunpack.c.l.b16 %v1468
        %v1508 = vunpack.c.l.b16 %v1469
        %v1509 = vunpack.c.l.b16 %v1470
        %v1510 = vunpack.c.l.b16 %v1471
        %v1511 = vunpack.c.l.b16 %v1472
        %v1512 = vunpack.c.l.b16 %v1473
        %v1513 = vunpack.c.l.b16 %v1474
        %v1514 = vunpack.c.l.b16 %v1475
        %v1515 = vunpack.c.l.b16 %v1476
        %v1516 = vunpack.c.l.b16 %v1477
        %v1517 = vunpack.c.l.b16 %v1478
        %v1518 = vunpack.c.l.b16 %v1479
        %v1519 = vunpack.c.l.b16 %v1480
        %v1520 = vunpack.c.l.b16 %v1481
        %v1521 = vpack.c.b16 %v1506, %v1505
        %v1522 = vpack.c.b16 %v1508, %v1507
        %v1523 = vpack.c.b16 %v1510, %v1509
        %v1524 = vpack.c.b16 %v1512, %v1511
        %v1525 = vpack.c.b16 %v1514, %v1513
        %v1526 = vpack.c.b16 %v1516, %v1515
        %v1527 = vpack.c.b16 %v1518, %v1517
        %v1528 = vpack.c.b16 %v1520, %v1519
        %1537 = vmatprep.subr.bf16.mxu0 0
        %1538 = vmatpush1.bf16.msra.mxu0 %v1521
        %1539 = vmatprep.subr.bf16.mxu0 0
        %1540 = vmatpush1.bf16.msra.mxu0 %v1522
        %1541 = vmatprep.subr.bf16.mxu0 0
        %1542 = vmatpush1.bf16.msra.mxu0 %v1523
        %1543 = vmatprep.subr.bf16.mxu0 0
        %1544 = vmatpush1.bf16.msra.mxu0 %v1524
        %1545 = vmatprep.subr.bf16.mxu0 0
        %1546 = vmatpush1.bf16.msra.mxu0 %v1525
        %1547 = vmatprep.subr.bf16.mxu0 0
        %1548 = vmatpush1.bf16.msra.mxu0 %v1526
        %1549 = vmatprep.subr.bf16.mxu0 0
        %1550 = vmatpush1.bf16.msra.mxu0 %v1527
        %1551 = vmatprep.subr.bf16.mxu0 0
        %1552 = vmatpush1.bf16.msra.mxu0 %v1528
        %1553 = vmatprep.subr.bf16.mxu0 0
        %1554 = vmatpush1.bf16.msra.mxu0 0
        %1555 = vmatprep.subr.bf16.mxu0 0
        %1556 = vmatpush1.bf16.msra.mxu0 0
        %1557 = vmatprep.subr.bf16.mxu0 0
        %1558 = vmatpush1.bf16.msra.mxu0 0
        %1559 = vmatprep.subr.bf16.mxu0 0
        %1560 = vmatpush1.bf16.msra.mxu0 0
        %1561 = vmatprep.subr.bf16.mxu0 0
        %1562 = vmatpush1.bf16.msra.mxu0 0
        %1563 = vmatprep.subr.bf16.mxu0 0
        %1564 = vmatpush1.bf16.msra.mxu0 0
        %1565 = vmatprep.subr.bf16.mxu0 0
        %1566 = vmatpush1.bf16.msra.mxu0 0
        %1567 = vmatprep.subr.bf16.mxu0 0
        %1568 = vmatpush1.bf16.msra.mxu0 0
        %1569 = vmatprep.mubr.bf16.mxu0 0
        %1570 = vmatmul.mubr.bf16.gmra.mrb[0].mxu0 %v1458
        %v1571 = vpop.f32.mrb[0].mxu0
        %v1572 = vadd.f32 %v1487, %v1571
        %v1573 = vpop.f32.mrb[0].mxu0
        %v1574 = vpop.f32.mrb[0].mxu0
        %v1575 = vadd.f32 %v1487, %v1574
        %v1576 = vpop.f32.mrb[0].mxu0
        %1577 = vmatprep.mubr.bf16.mxu0 0
        %1578 = vmatmul.mubr.bf16.gmra.mrb[0].mxu0 %v1459
        %v1579 = vpop.f32.mrb[0].mxu0
        %v1580 = vadd.f32 %v1487, %v1579
        %v1581 = vpop.f32.mrb[0].mxu0
        %v1582 = vpop.f32.mrb[0].mxu0
        %v1583 = vadd.f32 %v1487, %v1582
        %v1584 = vpop.f32.mrb[0].mxu0
        %1585 = vmatprep.mubr.bf16.mxu0 0
        %1586 = vmatmul.mubr.bf16.gmra.mrb[0].mxu0 %v1460
        %v1587 = vpop.f32.mrb[0].mxu0
        %v1588 = vadd.f32 %v1487, %v1587
        %v1589 = vpop.f32.mrb[0].mxu0
        %v1590 = vpop.f32.mrb[0].mxu0
        %v1591 = vadd.f32 %v1487, %v1590
        %v1592 = vpop.f32.mrb[0].mxu0
        %1593 = vmatprep.mubr.bf16.mxu0 0
        %1594 = vmatmul.mubr.bf16.gmra.mrb[0].mxu0 %v1461
        %v1595 = vpop.f32.mrb[0].mxu0
        %v1596 = vadd.f32 %v1487, %v1595
        %v1597 = vpop.f32.mrb[0].mxu0
        %v1598 = vpop.f32.mrb[0].mxu0
        %v1599 = vadd.f32 %v1487, %v1598
        %v1600 = vpop.f32.mrb[0].mxu0
        %1601 = vmatprep.mubr.bf16.mxu0 0
        %1602 = vmatmul.mubr.bf16.gmra.mrb[0].mxu0 %v1462
        %v1603 = vpop.f32.mrb[0].mxu0
        %v1604 = vadd.f32 %v1487, %v1603
        %v1605 = vpop.f32.mrb[0].mxu0
        %v1606 = vpop.f32.mrb[0].mxu0
        %v1607 = vadd.f32 %v1487, %v1606
        %v1608 = vpop.f32.mrb[0].mxu0
        %1609 = vmatprep.mubr.bf16.mxu0 0
        %1610 = vmatmul.mubr.bf16.gmra.mrb[0].mxu0 %v1463
        %v1611 = vpop.f32.mrb[0].mxu0
        %v1612 = vadd.f32 %v1487, %v1611
        %v1613 = vpop.f32.mrb[0].mxu0
        %v1614 = vpop.f32.mrb[0].mxu0
        %v1615 = vadd.f32 %v1487, %v1614
        %v1616 = vpop.f32.mrb[0].mxu0
        %1617 = vmatprep.mubr.bf16.mxu0 0
        %1618 = vmatmul.mubr.bf16.gmra.mrb[0].mxu0 %v1464
        %v1619 = vpop.f32.mrb[0].mxu0
        %v1620 = vadd.f32 %v1487, %v1619
        %v1621 = vpop.f32.mrb[0].mxu0
        %v1622 = vpop.f32.mrb[0].mxu0
        %v1623 = vadd.f32 %v1487, %v1622
        %v1624 = vpop.f32.mrb[0].mxu0
        %1625 = vmatprep.mubr.bf16.mxu0 0
        %1626 = vmatmul.mubr.bf16.gmra.mrb[0].mxu0 %v1465
        %v1627 = vpop.f32.mrb[0].mxu0
        %v1628 = vadd.f32 %v1487, %v1627
        %v1629 = vpop.f32.mrb[0].mxu0
        %v1630 = vpop.f32.mrb[0].mxu0
        %v1631 = vadd.f32 %v1487, %v1630
        %v1632 = vpop.f32.mrb[0].mxu0
        %1633 = vdwg.mxu0
        %v1634 = vpack.c.bf16 %v1575, %v1572
        %v1635 = vpack.c.bf16 %v1583, %v1580
        %v1636 = vpack.c.bf16 %v1591, %v1588
        %v1637 = vpack.c.bf16 %v1599, %v1596
        %v1638 = vpack.c.bf16 %v1607, %v1604
        %v1639 = vpack.c.bf16 %v1615, %v1612
        %v1640 = vpack.c.bf16 %v1623, %v1620
        %v1641 = vpack.c.bf16 %v1631, %v1628
        %v1642 = vshra.s32 %v697, 2
        %v1643 = vshra.s32 %v698, 2
        %v1644 = vshra.s32 %v699, 2
        %v1645 = vshra.s32 %v700, 2
        %v1646 = vshra.s32 %v701, 2
        %v1647 = vshra.s32 %v702, 2
        %v1648 = vshra.s32 %v703, 2
        %v1649 = vshra.s32 %v704, 2
        %v1650 = vshra.s32 %v705, 2
        %v1651 = vshra.s32 %v706, 2
        %v1652 = vshra.s32 %v707, 2
        %v1653 = vshra.s32 %v708, 2
        %v1654 = vshra.s32 %v709, 2
        %v1655 = vshra.s32 %v710, 2
        %v1656 = vshra.s32 %v711, 2
        %v1657 = vshra.s32 %v712, 2
        %v1658 = vand.u32 %v1642, 1
        %v1659 = vand.u32 %v1643, 1
        %v1660 = vand.u32 %v1644, 1
        %v1661 = vand.u32 %v1645, 1
        %v1662 = vand.u32 %v1646, 1
        %v1663 = vand.u32 %v1647, 1
        %v1664 = vand.u32 %v1648, 1
        %v1665 = vand.u32 %v1649, 1
        %v1666 = vand.u32 %v1650, 1
        %v1667 = vand.u32 %v1651, 1
        %v1668 = vand.u32 %v1652, 1
        %v1669 = vand.u32 %v1653, 1
        %v1670 = vand.u32 %v1654, 1
        %v1671 = vand.u32 %v1655, 1
        %v1672 = vand.u32 %v1656, 1
        %v1673 = vand.u32 %v1657, 1
        %vm1674 = vcmp.ne.s32.totalorder %v1658, 0
        %vm1675 = vcmp.ne.s32.totalorder %v1659, 0
        %vm1676 = vcmp.ne.s32.totalorder %v1660, 0
        %vm1677 = vcmp.ne.s32.totalorder %v1661, 0
        %vm1678 = vcmp.ne.s32.totalorder %v1662, 0
        %vm1679 = vcmp.ne.s32.totalorder %v1663, 0
        %vm1680 = vcmp.ne.s32.totalorder %v1664, 0
        %vm1681 = vcmp.ne.s32.totalorder %v1665, 0
        %vm1682 = vcmp.ne.s32.totalorder %v1666, 0
        %vm1683 = vcmp.ne.s32.totalorder %v1667, 0
        %vm1684 = vcmp.ne.s32.totalorder %v1668, 0
        %vm1685 = vcmp.ne.s32.totalorder %v1669, 0
        %vm1686 = vcmp.ne.s32.totalorder %v1670, 0
        %vm1687 = vcmp.ne.s32.totalorder %v1671, 0
        %vm1688 = vcmp.ne.s32.totalorder %v1672, 0
        %vm1689 = vcmp.ne.s32.totalorder %v1673, 0
        %vm1690 = vcmp.gt.bf16.partialorder %v1634, 0
        %vm1691 = vcmp.gt.bf16.partialorder %v1635, 0
        %vm1692 = vcmp.gt.bf16.partialorder %v1636, 0
        %vm1693 = vcmp.gt.bf16.partialorder %v1637, 0
        %vm1694 = vcmp.gt.bf16.partialorder %v1638, 0
        %vm1695 = vcmp.gt.bf16.partialorder %v1639, 0
        %vm1696 = vcmp.gt.bf16.partialorder %v1640, 0
        %vm1697 = vcmp.gt.bf16.partialorder %v1641, 0
        %v1698 = vsel %vm1690, 65537, 0
        %v1699 = vsel %vm1691, 65537, 0
        %v1700 = vsel %vm1692, 65537, 0
        %v1701 = vsel %vm1693, 65537, 0
        %v1702 = vsel %vm1694, 65537, 0
        %v1703 = vsel %vm1695, 65537, 0
        %v1704 = vsel %vm1696, 65537, 0
        %v1705 = vsel %vm1697, 65537, 0
        %v1706 = vunpack.c.l.b16 %v1698
        %v1707 = vunpack.c.h.b16 %v1698
        %v1708 = vunpack.c.l.b16 %v1699
        %v1709 = vunpack.c.h.b16 %v1699
        %v1710 = vunpack.c.l.b16 %v1700
        %v1711 = vunpack.c.h.b16 %v1700
        %v1712 = vunpack.c.l.b16 %v1701
        %v1713 = vunpack.c.h.b16 %v1701
        %v1714 = vunpack.c.l.b16 %v1702
        %v1715 = vunpack.c.h.b16 %v1702
        %v1716 = vunpack.c.l.b16 %v1703
        %v1717 = vunpack.c.h.b16 %v1703
        %v1718 = vunpack.c.l.b16 %v1704
        %v1719 = vunpack.c.h.b16 %v1704
        %v1720 = vunpack.c.l.b16 %v1705
        %v1721 = vunpack.c.h.b16 %v1705
        %v1722 = vpack.c.b16 %v1706, %v1706
        %v1723 = vpack.c.b16 %v1707, %v1707
        %v1724 = vpack.c.b16 %v1708, %v1708
        %v1725 = vpack.c.b16 %v1709, %v1709
        %v1726 = vpack.c.b16 %v1710, %v1710
        %v1727 = vpack.c.b16 %v1711, %v1711
        %v1728 = vpack.c.b16 %v1712, %v1712
        %v1729 = vpack.c.b16 %v1713, %v1713
        %v1730 = vpack.c.b16 %v1714, %v1714
        %v1731 = vpack.c.b16 %v1715, %v1715
        %v1732 = vpack.c.b16 %v1716, %v1716
        %v1733 = vpack.c.b16 %v1717, %v1717
        %v1734 = vpack.c.b16 %v1718, %v1718
        %v1735 = vpack.c.b16 %v1719, %v1719
        %v1736 = vpack.c.b16 %v1720, %v1720
        %v1737 = vpack.c.b16 %v1721, %v1721
        %vm1738 = vcmp.ne.s16.totalorder %v1722, 0
        %vm1739 = vcmp.ne.s16.totalorder %v1723, 0
        %vm1740 = vcmp.ne.s16.totalorder %v1724, 0
        %vm1741 = vcmp.ne.s16.totalorder %v1725, 0
        %vm1742 = vcmp.ne.s16.totalorder %v1726, 0
        %vm1743 = vcmp.ne.s16.totalorder %v1727, 0
        %vm1744 = vcmp.ne.s16.totalorder %v1728, 0
        %vm1745 = vcmp.ne.s16.totalorder %v1729, 0
        %vm1746 = vcmp.ne.s16.totalorder %v1730, 0
        %vm1747 = vcmp.ne.s16.totalorder %v1731, 0
        %vm1748 = vcmp.ne.s16.totalorder %v1732, 0
        %vm1749 = vcmp.ne.s16.totalorder %v1733, 0
        %vm1750 = vcmp.ne.s16.totalorder %v1734, 0
        %vm1751 = vcmp.ne.s16.totalorder %v1735, 0
        %vm1752 = vcmp.ne.s16.totalorder %v1736, 0
        %vm1753 = vcmp.ne.s16.totalorder %v1737, 0
        %v1754 = vsel %vm1738, 65537, 0
        %v1755 = vsel %vm1739, 65537, 0
        %v1756 = vsel %vm1740, 65537, 0
        %v1757 = vsel %vm1741, 65537, 0
        %v1758 = vsel %vm1742, 65537, 0
        %v1759 = vsel %vm1743, 65537, 0
        %v1760 = vsel %vm1744, 65537, 0
        %v1761 = vsel %vm1745, 65537, 0
        %v1762 = vsel %vm1746, 65537, 0
        %v1763 = vsel %vm1747, 65537, 0
        %v1764 = vsel %vm1748, 65537, 0
        %v1765 = vsel %vm1749, 65537, 0
        %v1766 = vsel %vm1750, 65537, 0
        %v1767 = vsel %vm1751, 65537, 0
        %v1768 = vsel %vm1752, 65537, 0
        %v1769 = vsel %vm1753, 65537, 0
        %v1770 = vunpack.c.l.b16 %v1754
        %v1771 = vunpack.c.l.b16 %v1755
        %v1772 = vunpack.c.l.b16 %v1756
        %v1773 = vunpack.c.l.b16 %v1757
        %v1774 = vunpack.c.l.b16 %v1758
        %v1775 = vunpack.c.l.b16 %v1759
        %v1776 = vunpack.c.l.b16 %v1760
        %v1777 = vunpack.c.l.b16 %v1761
        %v1778 = vunpack.c.l.b16 %v1762
        %v1779 = vunpack.c.l.b16 %v1763
        %v1780 = vunpack.c.l.b16 %v1764
        %v1781 = vunpack.c.l.b16 %v1765
        %v1782 = vunpack.c.l.b16 %v1766
        %v1783 = vunpack.c.l.b16 %v1767
        %v1784 = vunpack.c.l.b16 %v1768
        %v1785 = vunpack.c.l.b16 %v1769
        %vm1786 = vcmp.ne.s32.totalorder %v1770, 0
        %vm1787 = vcmp.ne.s32.totalorder %v1771, 0
        %vm1788 = vcmp.ne.s32.totalorder %v1772, 0
        %vm1789 = vcmp.ne.s32.totalorder %v1773, 0
        %vm1790 = vcmp.ne.s32.totalorder %v1774, 0
        %vm1791 = vcmp.ne.s32.totalorder %v1775, 0
        %vm1792 = vcmp.ne.s32.totalorder %v1776, 0
        %vm1793 = vcmp.ne.s32.totalorder %v1777, 0
        %vm1794 = vcmp.ne.s32.totalorder %v1778, 0
        %vm1795 = vcmp.ne.s32.totalorder %v1779, 0
        %vm1796 = vcmp.ne.s32.totalorder %v1780, 0
        %vm1797 = vcmp.ne.s32.totalorder %v1781, 0
        %vm1798 = vcmp.ne.s32.totalorder %v1782, 0
        %vm1799 = vcmp.ne.s32.totalorder %v1783, 0
        %vm1800 = vcmp.ne.s32.totalorder %v1784, 0
        %vm1801 = vcmp.ne.s32.totalorder %v1785, 0
        %vm1802 = vmand %vm1674, %vm1786
        %vm1803 = vmand %vm1675, %vm1787
        %vm1804 = vmand %vm1676, %vm1788
        %vm1805 = vmand %vm1677, %vm1789
        %vm1806 = vmand %vm1678, %vm1790
        %vm1807 = vmand %vm1679, %vm1791
        %vm1808 = vmand %vm1680, %vm1792
        %vm1809 = vmand %vm1681, %vm1793
        %vm1810 = vmand %vm1682, %vm1794
        %vm1811 = vmand %vm1683, %vm1795
        %vm1812 = vmand %vm1684, %vm1796
        %vm1813 = vmand %vm1685, %vm1797
        %vm1814 = vmand %vm1686, %vm1798
        %vm1815 = vmand %vm1687, %vm1799
        %vm1816 = vmand %vm1688, %vm1800
        %vm1817 = vmand %vm1689, %vm1801
        %vm1818 = vmpackc.low %vm1803, %vm1802
        %vm1819 = vmpackc.low %vm1805, %vm1804
        %vm1820 = vmpackc.low %vm1807, %vm1806
        %vm1821 = vmpackc.low %vm1809, %vm1808
        %vm1822 = vmpackc.low %vm1811, %vm1810
        %vm1823 = vmpackc.low %vm1813, %vm1812
        %vm1824 = vmpackc.low %vm1815, %vm1814
        %vm1825 = vmpackc.low %vm1817, %vm1816
        %v1826 = vsel %vm1818, %v1634, 0
        %v1827 = vsel %vm1819, %v1635, 0
        %v1828 = vsel %vm1820, %v1636, 0
        %v1829 = vsel %vm1821, %v1637, 0
        %v1830 = vsel %vm1822, %v1638, 0
        %v1831 = vsel %vm1823, %v1639, 0
        %v1832 = vsel %vm1824, %v1640, 0
        %v1833 = vsel %vm1825, %v1641, 0
        %v1834 = vld [vmem:[#allocation8] sm:$0xf]
        %v1835 = vld [vmem:[#allocation8 + $0x4] sm:$0xf]
        %v1836 = vld [vmem:[#allocation8 + $0x8] sm:$0xf]
        %v1837 = vld [vmem:[#allocation8 + $0xc] sm:$0xf]
        %v1838 = vld [vmem:[#allocation8 + $0x10] sm:$0xf]
        %v1839 = vld [vmem:[#allocation8 + $0x14] sm:$0xf]
        %v1840 = vld [vmem:[#allocation8 + $0x18] sm:$0xf]
        %v1841 = vld [vmem:[#allocation8 + $0x1c] sm:$0xf]
        %v1842 = vld [vmem:[#allocation8 + $0x20] sm:$0xf]
        %v1843 = vld [vmem:[#allocation8 + $0x24] sm:$0xf]
        %v1844 = vld [vmem:[#allocation8 + $0x28] sm:$0xf]
        %v1845 = vld [vmem:[#allocation8 + $0x2c] sm:$0xf]
        %v1846 = vld [vmem:[#allocation8 + $0x30] sm:$0xf]
        %v1847 = vld [vmem:[#allocation8 + $0x34] sm:$0xf]
        %v1848 = vld [vmem:[#allocation8 + $0x38] sm:$0xf]
        %v1849 = vld [vmem:[#allocation8 + $0x3c] sm:$0xf]
        %v1850 = vld [vmem:[#allocation9] sm:$0x1]
        %v1852 = vlaneseq
        %v1853 = vshrl.u32 %v1852, 7
        %v1854 = vsub.s32 0, %v1853
        %v1855 = vrot.slane %v1850, %v1854
        %v1873 = vunpack.c.l.b16 %v1834
        %v1874 = vunpack.c.l.b16 %v1835
        %v1875 = vunpack.c.l.b16 %v1836
        %v1876 = vunpack.c.l.b16 %v1837
        %v1877 = vunpack.c.l.b16 %v1838
        %v1878 = vunpack.c.l.b16 %v1839
        %v1879 = vunpack.c.l.b16 %v1840
        %v1880 = vunpack.c.l.b16 %v1841
        %v1881 = vunpack.c.l.b16 %v1842
        %v1882 = vunpack.c.l.b16 %v1843
        %v1883 = vunpack.c.l.b16 %v1844
        %v1884 = vunpack.c.l.b16 %v1845
        %v1885 = vunpack.c.l.b16 %v1846
        %v1886 = vunpack.c.l.b16 %v1847
        %v1887 = vunpack.c.l.b16 %v1848
        %v1888 = vunpack.c.l.b16 %v1849
        %v1889 = vpack.c.b16 %v1874, %v1873
        %v1890 = vpack.c.b16 %v1876, %v1875
        %v1891 = vpack.c.b16 %v1878, %v1877
        %v1892 = vpack.c.b16 %v1880, %v1879
        %v1893 = vpack.c.b16 %v1882, %v1881
        %v1894 = vpack.c.b16 %v1884, %v1883
        %v1895 = vpack.c.b16 %v1886, %v1885
        %v1896 = vpack.c.b16 %v1888, %v1887
        %1905 = vmatprep.subr.bf16.mxu0 0
        %1906 = vmatpush1.bf16.msra.mxu0 %v1889
        %1907 = vmatprep.subr.bf16.mxu0 0
        %1908 = vmatpush1.bf16.msra.mxu0 %v1890
        %1909 = vmatprep.subr.bf16.mxu0 0
        %1910 = vmatpush1.bf16.msra.mxu0 %v1891
        %1911 = vmatprep.subr.bf16.mxu0 0
        %1912 = vmatpush1.bf16.msra.mxu0 %v1892
        %1913 = vmatprep.subr.bf16.mxu0 0
        %1914 = vmatpush1.bf16.msra.mxu0 %v1893
        %1915 = vmatprep.subr.bf16.mxu0 0
        %1916 = vmatpush1.bf16.msra.mxu0 %v1894
        %1917 = vmatprep.subr.bf16.mxu0 0
        %1918 = vmatpush1.bf16.msra.mxu0 %v1895
        %1919 = vmatprep.subr.bf16.mxu0 0
        %1920 = vmatpush1.bf16.msra.mxu0 %v1896
        %1921 = vmatprep.subr.bf16.mxu0 0
        %1922 = vmatpush1.bf16.msra.mxu0 0
        %1923 = vmatprep.subr.bf16.mxu0 0
        %1924 = vmatpush1.bf16.msra.mxu0 0
        %1925 = vmatprep.subr.bf16.mxu0 0
        %1926 = vmatpush1.bf16.msra.mxu0 0
        %1927 = vmatprep.subr.bf16.mxu0 0
        %1928 = vmatpush1.bf16.msra.mxu0 0
        %1929 = vmatprep.subr.bf16.mxu0 0
        %1930 = vmatpush1.bf16.msra.mxu0 0
        %1931 = vmatprep.subr.bf16.mxu0 0
        %1932 = vmatpush1.bf16.msra.mxu0 0
        %1933 = vmatprep.subr.bf16.mxu0 0
        %1934 = vmatpush1.bf16.msra.mxu0 0
        %1935 = vmatprep.subr.bf16.mxu0 0
        %1936 = vmatpush1.bf16.msra.mxu0 0
        %1937 = vmatprep.mubr.bf16.mxu0 0
        %1938 = vmatmul.mubr.bf16.gmra.mrb[0].mxu0 %v1826
        %v1939 = vpop.f32.mrb[0].mxu0
        %v1940 = vadd.f32 %v1855, %v1939
        %v1941 = vpop.f32.mrb[0].mxu0
        %v1942 = vpop.f32.mrb[0].mxu0
        %v1943 = vadd.f32 %v1855, %v1942
        %v1944 = vpop.f32.mrb[0].mxu0
        %1945 = vmatprep.mubr.bf16.mxu0 0
        %1946 = vmatmul.mubr.bf16.gmra.mrb[0].mxu0 %v1827
        %v1947 = vpop.f32.mrb[0].mxu0
        %v1948 = vadd.f32 %v1855, %v1947
        %v1949 = vpop.f32.mrb[0].mxu0
        %v1950 = vpop.f32.mrb[0].mxu0
        %v1951 = vadd.f32 %v1855, %v1950
        %v1952 = vpop.f32.mrb[0].mxu0
        %1953 = vmatprep.mubr.bf16.mxu0 0
        %1954 = vmatmul.mubr.bf16.gmra.mrb[0].mxu0 %v1828
        %v1955 = vpop.f32.mrb[0].mxu0
        %v1956 = vadd.f32 %v1855, %v1955
        %v1957 = vpop.f32.mrb[0].mxu0
        %v1958 = vpop.f32.mrb[0].mxu0
        %v1959 = vadd.f32 %v1855, %v1958
        %v1960 = vpop.f32.mrb[0].mxu0
        %1961 = vmatprep.mubr.bf16.mxu0 0
        %1962 = vmatmul.mubr.bf16.gmra.mrb[0].mxu0 %v1829
        %v1963 = vpop.f32.mrb[0].mxu0
        %v1964 = vadd.f32 %v1855, %v1963
        %v1965 = vpop.f32.mrb[0].mxu0
        %v1966 = vpop.f32.mrb[0].mxu0
        %v1967 = vadd.f32 %v1855, %v1966
        %v1968 = vpop.f32.mrb[0].mxu0
        %1969 = vmatprep.mubr.bf16.mxu0 0
        %1970 = vmatmul.mubr.bf16.gmra.mrb[0].mxu0 %v1830
        %v1971 = vpop.f32.mrb[0].mxu0
        %v1972 = vadd.f32 %v1855, %v1971
        %v1973 = vpop.f32.mrb[0].mxu0
        %v1974 = vpop.f32.mrb[0].mxu0
        %v1975 = vadd.f32 %v1855, %v1974
        %v1976 = vpop.f32.mrb[0].mxu0
        %1977 = vmatprep.mubr.bf16.mxu0 0
        %1978 = vmatmul.mubr.bf16.gmra.mrb[0].mxu0 %v1831
        %v1979 = vpop.f32.mrb[0].mxu0
        %v1980 = vadd.f32 %v1855, %v1979
        %v1981 = vpop.f32.mrb[0].mxu0
        %v1982 = vpop.f32.mrb[0].mxu0
        %v1983 = vadd.f32 %v1855, %v1982
        %v1984 = vpop.f32.mrb[0].mxu0
        %1985 = vmatprep.mubr.bf16.mxu0 0
        %1986 = vmatmul.mubr.bf16.gmra.mrb[0].mxu0 %v1832
        %v1987 = vpop.f32.mrb[0].mxu0
        %v1988 = vadd.f32 %v1855, %v1987
        %v1989 = vpop.f32.mrb[0].mxu0
        %v1990 = vpop.f32.mrb[0].mxu0
        %v1991 = vadd.f32 %v1855, %v1990
        %v1992 = vpop.f32.mrb[0].mxu0
        %1993 = vmatprep.mubr.bf16.mxu0 0
        %1994 = vmatmul.mubr.bf16.gmra.mrb[0].mxu0 %v1833
        %v1995 = vpop.f32.mrb[0].mxu0
        %v1996 = vadd.f32 %v1855, %v1995
        %v1997 = vpop.f32.mrb[0].mxu0
        %v1998 = vpop.f32.mrb[0].mxu0
        %v1999 = vadd.f32 %v1855, %v1998
        %v2000 = vpop.f32.mrb[0].mxu0
        %2001 = vdwg.mxu0
        %v2002 = vpack.c.bf16 %v1943, %v1940
        %v2003 = vpack.c.bf16 %v1951, %v1948
        %v2004 = vpack.c.bf16 %v1959, %v1956
        %v2005 = vpack.c.bf16 %v1967, %v1964
        %v2006 = vpack.c.bf16 %v1975, %v1972
        %v2007 = vpack.c.bf16 %v1983, %v1980
        %v2008 = vpack.c.bf16 %v1991, %v1988
        %v2009 = vpack.c.bf16 %v1999, %v1996
        %v2010 = vshra.s32 %v697, 3
        %v2011 = vshra.s32 %v698, 3
        %v2012 = vshra.s32 %v699, 3
        %v2013 = vshra.s32 %v700, 3
        %v2014 = vshra.s32 %v701, 3
        %v2015 = vshra.s32 %v702, 3
        %v2016 = vshra.s32 %v703, 3
        %v2017 = vshra.s32 %v704, 3
        %v2018 = vshra.s32 %v705, 3
        %v2019 = vshra.s32 %v706, 3
        %v2020 = vshra.s32 %v707, 3
        %v2021 = vshra.s32 %v708, 3
        %v2022 = vshra.s32 %v709, 3
        %v2023 = vshra.s32 %v710, 3
        %v2024 = vshra.s32 %v711, 3
        %v2025 = vshra.s32 %v712, 3
        %v2026 = vand.u32 %v2010, 1
        %v2027 = vand.u32 %v2011, 1
        %v2028 = vand.u32 %v2012, 1
        %v2029 = vand.u32 %v2013, 1
        %v2030 = vand.u32 %v2014, 1
        %v2031 = vand.u32 %v2015, 1
        %v2032 = vand.u32 %v2016, 1
        %v2033 = vand.u32 %v2017, 1
        %v2034 = vand.u32 %v2018, 1
        %v2035 = vand.u32 %v2019, 1
        %v2036 = vand.u32 %v2020, 1
        %v2037 = vand.u32 %v2021, 1
        %v2038 = vand.u32 %v2022, 1
        %v2039 = vand.u32 %v2023, 1
        %v2040 = vand.u32 %v2024, 1
        %v2041 = vand.u32 %v2025, 1
        %vm2042 = vcmp.ne.s32.totalorder %v2026, 0
        %vm2043 = vcmp.ne.s32.totalorder %v2027, 0
        %vm2044 = vcmp.ne.s32.totalorder %v2028, 0
        %vm2045 = vcmp.ne.s32.totalorder %v2029, 0
        %vm2046 = vcmp.ne.s32.totalorder %v2030, 0
        %vm2047 = vcmp.ne.s32.totalorder %v2031, 0
        %vm2048 = vcmp.ne.s32.totalorder %v2032, 0
        %vm2049 = vcmp.ne.s32.totalorder %v2033, 0
        %vm2050 = vcmp.ne.s32.totalorder %v2034, 0
        %vm2051 = vcmp.ne.s32.totalorder %v2035, 0
        %vm2052 = vcmp.ne.s32.totalorder %v2036, 0
        %vm2053 = vcmp.ne.s32.totalorder %v2037, 0
        %vm2054 = vcmp.ne.s32.totalorder %v2038, 0
        %vm2055 = vcmp.ne.s32.totalorder %v2039, 0
        %vm2056 = vcmp.ne.s32.totalorder %v2040, 0
        %vm2057 = vcmp.ne.s32.totalorder %v2041, 0
        %vm2058 = vcmp.gt.bf16.partialorder %v2002, 0
        %vm2059 = vcmp.gt.bf16.partialorder %v2003, 0
        %vm2060 = vcmp.gt.bf16.partialorder %v2004, 0
        %vm2061 = vcmp.gt.bf16.partialorder %v2005, 0
        %vm2062 = vcmp.gt.bf16.partialorder %v2006, 0
        %vm2063 = vcmp.gt.bf16.partialorder %v2007, 0
        %vm2064 = vcmp.gt.bf16.partialorder %v2008, 0
        %vm2065 = vcmp.gt.bf16.partialorder %v2009, 0
        %v2066 = vsel %vm2058, 65537, 0
        %v2067 = vsel %vm2059, 65537, 0
        %v2068 = vsel %vm2060, 65537, 0
        %v2069 = vsel %vm2061, 65537, 0
        %v2070 = vsel %vm2062, 65537, 0
        %v2071 = vsel %vm2063, 65537, 0
        %v2072 = vsel %vm2064, 65537, 0
        %v2073 = vsel %vm2065, 65537, 0
        %v2074 = vunpack.c.l.b16 %v2066
        %v2075 = vunpack.c.h.b16 %v2066
        %v2076 = vunpack.c.l.b16 %v2067
        %v2077 = vunpack.c.h.b16 %v2067
        %v2078 = vunpack.c.l.b16 %v2068
        %v2079 = vunpack.c.h.b16 %v2068
        %v2080 = vunpack.c.l.b16 %v2069
        %v2081 = vunpack.c.h.b16 %v2069
        %v2082 = vunpack.c.l.b16 %v2070
        %v2083 = vunpack.c.h.b16 %v2070
        %v2084 = vunpack.c.l.b16 %v2071
        %v2085 = vunpack.c.h.b16 %v2071
        %v2086 = vunpack.c.l.b16 %v2072
        %v2087 = vunpack.c.h.b16 %v2072
        %v2088 = vunpack.c.l.b16 %v2073
        %v2089 = vunpack.c.h.b16 %v2073
        %v2090 = vpack.c.b16 %v2074, %v2074
        %v2091 = vpack.c.b16 %v2075, %v2075
        %v2092 = vpack.c.b16 %v2076, %v2076
        %v2093 = vpack.c.b16 %v2077, %v2077
        %v2094 = vpack.c.b16 %v2078, %v2078
        %v2095 = vpack.c.b16 %v2079, %v2079
        %v2096 = vpack.c.b16 %v2080, %v2080
        %v2097 = vpack.c.b16 %v2081, %v2081
        %v2098 = vpack.c.b16 %v2082, %v2082
        %v2099 = vpack.c.b16 %v2083, %v2083
        %v2100 = vpack.c.b16 %v2084, %v2084
        %v2101 = vpack.c.b16 %v2085, %v2085
        %v2102 = vpack.c.b16 %v2086, %v2086
        %v2103 = vpack.c.b16 %v2087, %v2087
        %v2104 = vpack.c.b16 %v2088, %v2088
        %v2105 = vpack.c.b16 %v2089, %v2089
        %vm2106 = vcmp.ne.s16.totalorder %v2090, 0
        %vm2107 = vcmp.ne.s16.totalorder %v2091, 0
        %vm2108 = vcmp.ne.s16.totalorder %v2092, 0
        %vm2109 = vcmp.ne.s16.totalorder %v2093, 0
        %vm2110 = vcmp.ne.s16.totalorder %v2094, 0
        %vm2111 = vcmp.ne.s16.totalorder %v2095, 0
        %vm2112 = vcmp.ne.s16.totalorder %v2096, 0
        %vm2113 = vcmp.ne.s16.totalorder %v2097, 0
        %vm2114 = vcmp.ne.s16.totalorder %v2098, 0
        %vm2115 = vcmp.ne.s16.totalorder %v2099, 0
        %vm2116 = vcmp.ne.s16.totalorder %v2100, 0
        %vm2117 = vcmp.ne.s16.totalorder %v2101, 0
        %vm2118 = vcmp.ne.s16.totalorder %v2102, 0
        %vm2119 = vcmp.ne.s16.totalorder %v2103, 0
        %vm2120 = vcmp.ne.s16.totalorder %v2104, 0
        %vm2121 = vcmp.ne.s16.totalorder %v2105, 0
        %v2122 = vsel %vm2106, 65537, 0
        %v2123 = vsel %vm2107, 65537, 0
        %v2124 = vsel %vm2108, 65537, 0
        %v2125 = vsel %vm2109, 65537, 0
        %v2126 = vsel %vm2110, 65537, 0
        %v2127 = vsel %vm2111, 65537, 0
        %v2128 = vsel %vm2112, 65537, 0
        %v2129 = vsel %vm2113, 65537, 0
        %v2130 = vsel %vm2114, 65537, 0
        %v2131 = vsel %vm2115, 65537, 0
        %v2132 = vsel %vm2116, 65537, 0
        %v2133 = vsel %vm2117, 65537, 0
        %v2134 = vsel %vm2118, 65537, 0
        %v2135 = vsel %vm2119, 65537, 0
        %v2136 = vsel %vm2120, 65537, 0
        %v2137 = vsel %vm2121, 65537, 0
        %v2138 = vunpack.c.l.b16 %v2122
        %v2139 = vunpack.c.l.b16 %v2123
        %v2140 = vunpack.c.l.b16 %v2124
        %v2141 = vunpack.c.l.b16 %v2125
        %v2142 = vunpack.c.l.b16 %v2126
        %v2143 = vunpack.c.l.b16 %v2127
        %v2144 = vunpack.c.l.b16 %v2128
        %v2145 = vunpack.c.l.b16 %v2129
        %v2146 = vunpack.c.l.b16 %v2130
        %v2147 = vunpack.c.l.b16 %v2131
        %v2148 = vunpack.c.l.b16 %v2132
        %v2149 = vunpack.c.l.b16 %v2133
        %v2150 = vunpack.c.l.b16 %v2134
        %v2151 = vunpack.c.l.b16 %v2135
        %v2152 = vunpack.c.l.b16 %v2136
        %v2153 = vunpack.c.l.b16 %v2137
        %vm2154 = vcmp.ne.s32.totalorder %v2138, 0
        %vm2155 = vcmp.ne.s32.totalorder %v2139, 0
        %vm2156 = vcmp.ne.s32.totalorder %v2140, 0
        %vm2157 = vcmp.ne.s32.totalorder %v2141, 0
        %vm2158 = vcmp.ne.s32.totalorder %v2142, 0
        %vm2159 = vcmp.ne.s32.totalorder %v2143, 0
        %vm2160 = vcmp.ne.s32.totalorder %v2144, 0
        %vm2161 = vcmp.ne.s32.totalorder %v2145, 0
        %vm2162 = vcmp.ne.s32.totalorder %v2146, 0
        %vm2163 = vcmp.ne.s32.totalorder %v2147, 0
        %vm2164 = vcmp.ne.s32.totalorder %v2148, 0
        %vm2165 = vcmp.ne.s32.totalorder %v2149, 0
        %vm2166 = vcmp.ne.s32.totalorder %v2150, 0
        %vm2167 = vcmp.ne.s32.totalorder %v2151, 0
        %vm2168 = vcmp.ne.s32.totalorder %v2152, 0
        %vm2169 = vcmp.ne.s32.totalorder %v2153, 0
        %vm2170 = vmand %vm2042, %vm2154
        %vm2171 = vmand %vm2043, %vm2155
        %vm2172 = vmand %vm2044, %vm2156
        %vm2173 = vmand %vm2045, %vm2157
        %vm2174 = vmand %vm2046, %vm2158
        %vm2175 = vmand %vm2047, %vm2159
        %vm2176 = vmand %vm2048, %vm2160
        %vm2177 = vmand %vm2049, %vm2161
        %vm2178 = vmand %vm2050, %vm2162
        %vm2179 = vmand %vm2051, %vm2163
        %vm2180 = vmand %vm2052, %vm2164
        %vm2181 = vmand %vm2053, %vm2165
        %vm2182 = vmand %vm2054, %vm2166
        %vm2183 = vmand %vm2055, %vm2167
        %vm2184 = vmand %vm2056, %vm2168
        %vm2185 = vmand %vm2057, %vm2169
        %vm2186 = vmpackc.low %vm2171, %vm2170
        %vm2187 = vmpackc.low %vm2173, %vm2172
        %vm2188 = vmpackc.low %vm2175, %vm2174
        %vm2189 = vmpackc.low %vm2177, %vm2176
        %vm2190 = vmpackc.low %vm2179, %vm2178
        %vm2191 = vmpackc.low %vm2181, %vm2180
        %vm2192 = vmpackc.low %vm2183, %vm2182
        %vm2193 = vmpackc.low %vm2185, %vm2184
        %v2194 = vsel %vm2186, %v2002, 0
        %v2195 = vsel %vm2187, %v2003, 0
        %v2196 = vsel %vm2188, %v2004, 0
        %v2197 = vsel %vm2189, %v2005, 0
        %v2198 = vsel %vm2190, %v2006, 0
        %v2199 = vsel %vm2191, %v2007, 0
        %v2200 = vsel %vm2192, %v2008, 0
        %v2201 = vsel %vm2193, %v2009, 0
        %v2202 = vld [vmem:[%s10] sm:$0xf]
        %v2203 = vld [vmem:[%s10 + $0x4] sm:$0xf]
        %v2204 = vld [vmem:[%s10 + $0x8] sm:$0xf]
        %v2205 = vld [vmem:[%s10 + $0xc] sm:$0xf]
        %v2206 = vld [vmem:[%s10 + $0x10] sm:$0xf]
        %v2207 = vld [vmem:[%s10 + $0x14] sm:$0xf]
        %v2208 = vld [vmem:[%s10 + $0x18] sm:$0xf]
        %v2209 = vld [vmem:[%s10 + $0x1c] sm:$0xf]
        %v2210 = vld [vmem:[%s10 + $0x20] sm:$0xf]
        %v2211 = vld [vmem:[%s10 + $0x24] sm:$0xf]
        %v2212 = vld [vmem:[%s10 + $0x28] sm:$0xf]
        %v2213 = vld [vmem:[%s10 + $0x2c] sm:$0xf]
        %v2214 = vld [vmem:[%s10 + $0x30] sm:$0xf]
        %v2215 = vld [vmem:[%s10 + $0x34] sm:$0xf]
        %v2216 = vld [vmem:[%s10 + $0x38] sm:$0xf]
        %v2217 = vld [vmem:[%s10 + $0x3c] sm:$0xf]
        %v2218 = vld [vmem:[%s11] sm:$0x1]
        %v2220 = vlaneseq
        %v2221 = vshrl.u32 %v2220, 7
        %v2222 = vsub.s32 0, %v2221
        %v2223 = vrot.slane %v2218, %v2222
        %v2241 = vunpack.c.l.b16 %v2202
        %v2242 = vunpack.c.l.b16 %v2203
        %v2243 = vunpack.c.l.b16 %v2204
        %v2244 = vunpack.c.l.b16 %v2205
        %v2245 = vunpack.c.l.b16 %v2206
        %v2246 = vunpack.c.l.b16 %v2207
        %v2247 = vunpack.c.l.b16 %v2208
        %v2248 = vunpack.c.l.b16 %v2209
        %v2249 = vunpack.c.l.b16 %v2210
        %v2250 = vunpack.c.l.b16 %v2211
        %v2251 = vunpack.c.l.b16 %v2212
        %v2252 = vunpack.c.l.b16 %v2213
        %v2253 = vunpack.c.l.b16 %v2214
        %v2254 = vunpack.c.l.b16 %v2215
        %v2255 = vunpack.c.l.b16 %v2216
        %v2256 = vunpack.c.l.b16 %v2217
        %v2257 = vpack.c.b16 %v2242, %v2241
        %v2258 = vpack.c.b16 %v2244, %v2243
        %v2259 = vpack.c.b16 %v2246, %v2245
        %v2260 = vpack.c.b16 %v2248, %v2247
        %v2261 = vpack.c.b16 %v2250, %v2249
        %v2262 = vpack.c.b16 %v2252, %v2251
        %v2263 = vpack.c.b16 %v2254, %v2253
        %v2264 = vpack.c.b16 %v2256, %v2255
        %2273 = vmatprep.subr.bf16.mxu0 0
        %2274 = vmatpush1.bf16.msra.mxu0 %v2257
        %2275 = vmatprep.subr.bf16.mxu0 0
        %2276 = vmatpush1.bf16.msra.mxu0 %v2258
        %2277 = vmatprep.subr.bf16.mxu0 0
        %2278 = vmatpush1.bf16.msra.mxu0 %v2259
        %2279 = vmatprep.subr.bf16.mxu0 0
        %2280 = vmatpush1.bf16.msra.mxu0 %v2260
        %2281 = vmatprep.subr.bf16.mxu0 0
        %2282 = vmatpush1.bf16.msra.mxu0 %v2261
        %2283 = vmatprep.subr.bf16.mxu0 0
        %2284 = vmatpush1.bf16.msra.mxu0 %v2262
        %2285 = vmatprep.subr.bf16.mxu0 0
        %2286 = vmatpush1.bf16.msra.mxu0 %v2263
        %2287 = vmatprep.subr.bf16.mxu0 0
        %2288 = vmatpush1.bf16.msra.mxu0 %v2264
        %2289 = vmatprep.subr.bf16.mxu0 0
        %2290 = vmatpush1.bf16.msra.mxu0 0
        %2291 = vmatprep.subr.bf16.mxu0 0
        %2292 = vmatpush1.bf16.msra.mxu0 0
        %2293 = vmatprep.subr.bf16.mxu0 0
        %2294 = vmatpush1.bf16.msra.mxu0 0
        %2295 = vmatprep.subr.bf16.mxu0 0
        %2296 = vmatpush1.bf16.msra.mxu0 0
        %2297 = vmatprep.subr.bf16.mxu0 0
        %2298 = vmatpush1.bf16.msra.mxu0 0
        %2299 = vmatprep.subr.bf16.mxu0 0
        %2300 = vmatpush1.bf16.msra.mxu0 0
        %2301 = vmatprep.subr.bf16.mxu0 0
        %2302 = vmatpush1.bf16.msra.mxu0 0
        %2303 = vmatprep.subr.bf16.mxu0 0
        %2304 = vmatpush1.bf16.msra.mxu0 0
        %2305 = vmatprep.mubr.bf16.mxu0 0
        %2306 = vmatmul.mubr.bf16.gmra.mrb[0].mxu0 %v2194
        %v2307 = vpop.f32.mrb[0].mxu0
        %v2308 = vadd.f32 %v2223, %v2307
        %v2309 = vpop.f32.mrb[0].mxu0
        %v2310 = vpop.f32.mrb[0].mxu0
        %v2311 = vadd.f32 %v2223, %v2310
        %v2312 = vpop.f32.mrb[0].mxu0
        %2313 = vmatprep.mubr.bf16.mxu0 0
        %2314 = vmatmul.mubr.bf16.gmra.mrb[0].mxu0 %v2195
        %v2315 = vpop.f32.mrb[0].mxu0
        %v2316 = vadd.f32 %v2223, %v2315
        %v2317 = vpop.f32.mrb[0].mxu0
        %v2318 = vpop.f32.mrb[0].mxu0
        %v2319 = vadd.f32 %v2223, %v2318
        %v2320 = vpop.f32.mrb[0].mxu0
        %2321 = vmatprep.mubr.bf16.mxu0 0
        %2322 = vmatmul.mubr.bf16.gmra.mrb[0].mxu0 %v2196
        %v2323 = vpop.f32.mrb[0].mxu0
        %v2324 = vadd.f32 %v2223, %v2323
        %v2325 = vpop.f32.mrb[0].mxu0
        %v2326 = vpop.f32.mrb[0].mxu0
        %v2327 = vadd.f32 %v2223, %v2326
        %v2328 = vpop.f32.mrb[0].mxu0
        %2329 = vmatprep.mubr.bf16.mxu0 0
        %2330 = vmatmul.mubr.bf16.gmra.mrb[0].mxu0 %v2197
        %v2331 = vpop.f32.mrb[0].mxu0
        %v2332 = vadd.f32 %v2223, %v2331
        %v2333 = vpop.f32.mrb[0].mxu0
        %v2334 = vpop.f32.mrb[0].mxu0
        %v2335 = vadd.f32 %v2223, %v2334
        %v2336 = vpop.f32.mrb[0].mxu0
        %2337 = vmatprep.mubr.bf16.mxu0 0
        %2338 = vmatmul.mubr.bf16.gmra.mrb[0].mxu0 %v2198
        %v2339 = vpop.f32.mrb[0].mxu0
        %v2340 = vadd.f32 %v2223, %v2339
        %v2341 = vpop.f32.mrb[0].mxu0
        %v2342 = vpop.f32.mrb[0].mxu0
        %v2343 = vadd.f32 %v2223, %v2342
        %v2344 = vpop.f32.mrb[0].mxu0
        %2345 = vmatprep.mubr.bf16.mxu0 0
        %2346 = vmatmul.mubr.bf16.gmra.mrb[0].mxu0 %v2199
        %v2347 = vpop.f32.mrb[0].mxu0
        %v2348 = vadd.f32 %v2223, %v2347
        %v2349 = vpop.f32.mrb[0].mxu0
        %v2350 = vpop.f32.mrb[0].mxu0
        %v2351 = vadd.f32 %v2223, %v2350
        %v2352 = vpop.f32.mrb[0].mxu0
        %2353 = vmatprep.mubr.bf16.mxu0 0
        %2354 = vmatmul.mubr.bf16.gmra.mrb[0].mxu0 %v2200
        %v2355 = vpop.f32.mrb[0].mxu0
        %v2356 = vadd.f32 %v2223, %v2355
        %v2357 = vpop.f32.mrb[0].mxu0
        %v2358 = vpop.f32.mrb[0].mxu0
        %v2359 = vadd.f32 %v2223, %v2358
        %v2360 = vpop.f32.mrb[0].mxu0
        %2361 = vmatprep.mubr.bf16.mxu0 0
        %2362 = vmatmul.mubr.bf16.gmra.mrb[0].mxu0 %v2201
        %v2363 = vpop.f32.mrb[0].mxu0
        %v2364 = vadd.f32 %v2223, %v2363
        %v2365 = vpop.f32.mrb[0].mxu0
        %v2366 = vpop.f32.mrb[0].mxu0
        %v2367 = vadd.f32 %v2223, %v2366
        %v2368 = vpop.f32.mrb[0].mxu0
        %2369 = vdwg.mxu0
        %2370 = vadd.xlane.f32.xlu0 %v2308
        %v2371 = vpop.xlane.xlu0 %2370
        %2372 = vadd.xlane.f32.xlu0 %v2311
        %v2373 = vpop.xlane.xlu0 %2372
        %2374 = vadd.xlane.f32.xlu0 %v2316
        %v2375 = vpop.xlane.xlu0 %2374
        %2376 = vadd.xlane.f32.xlu0 %v2319
        %v2377 = vpop.xlane.xlu0 %2376
        %2378 = vadd.xlane.f32.xlu0 %v2324
        %v2379 = vpop.xlane.xlu0 %2378
        %2380 = vadd.xlane.f32.xlu0 %v2327
        %v2381 = vpop.xlane.xlu0 %2380
        %2382 = vadd.xlane.f32.xlu0 %v2332
        %v2383 = vpop.xlane.xlu0 %2382
        %2384 = vadd.xlane.f32.xlu0 %v2335
        %v2385 = vpop.xlane.xlu0 %2384
        %2386 = vadd.xlane.f32.xlu0 %v2340
        %v2387 = vpop.xlane.xlu0 %2386
        %2388 = vadd.xlane.f32.xlu0 %v2343
        %v2389 = vpop.xlane.xlu0 %2388
        %2390 = vadd.xlane.f32.xlu0 %v2348
        %v2391 = vpop.xlane.xlu0 %2390
        %2392 = vadd.xlane.f32.xlu0 %v2351
        %v2393 = vpop.xlane.xlu0 %2392
        %2394 = vadd.xlane.f32.xlu0 %v2356
        %v2395 = vpop.xlane.xlu0 %2394
        %2396 = vadd.xlane.f32.xlu0 %v2359
        %v2397 = vpop.xlane.xlu0 %2396
        %2398 = vadd.xlane.f32.xlu0 %v2364
        %v2399 = vpop.xlane.xlu0 %2398
        %2400 = vadd.xlane.f32.xlu0 %v2367
        %v2401 = vpop.xlane.xlu0 %2400
        %v2402 = vmul.f32 %v2371, 0.5
        %v2403 = vmul.f32 %v2373, 0.5
        %v2404 = vmul.f32 %v2375, 0.5
        %v2405 = vmul.f32 %v2377, 0.5
        %v2406 = vmul.f32 %v2379, 0.5
        %v2407 = vmul.f32 %v2381, 0.5
        %v2408 = vmul.f32 %v2383, 0.5
        %v2409 = vmul.f32 %v2385, 0.5
        %v2410 = vmul.f32 %v2387, 0.5
        %v2411 = vmul.f32 %v2389, 0.5
        %v2412 = vmul.f32 %v2391, 0.5
        %v2413 = vmul.f32 %v2393, 0.5
        %v2414 = vmul.f32 %v2395, 0.5
        %v2415 = vmul.f32 %v2397, 0.5
        %v2416 = vmul.f32 %v2399, 0.5
        %v2417 = vmul.f32 %v2401, 0.5
        %v2418 = vtanh.pop %v2402
        %v2419 = vtanh.pop %v2403
        %v2420 = vtanh.pop %v2404
        %v2421 = vtanh.pop %v2405
        %v2422 = vtanh.pop %v2406
        %v2423 = vtanh.pop %v2407
        %v2424 = vtanh.pop %v2408
        %v2425 = vtanh.pop %v2409
        %v2426 = vtanh.pop %v2410
        %v2427 = vtanh.pop %v2411
        %v2428 = vtanh.pop %v2412
        %v2429 = vtanh.pop %v2413
        %v2430 = vtanh.pop %v2414
        %v2431 = vtanh.pop %v2415
        %v2432 = vtanh.pop %v2416
        %v2433 = vtanh.pop %v2417
        %v2434 = vadd.f32 %v2418, 1.0
        %v2435 = vadd.f32 %v2419, 1.0
        %v2436 = vadd.f32 %v2420, 1.0
        %v2437 = vadd.f32 %v2421, 1.0
        %v2438 = vadd.f32 %v2422, 1.0
        %v2439 = vadd.f32 %v2423, 1.0
        %v2440 = vadd.f32 %v2424, 1.0
        %v2441 = vadd.f32 %v2425, 1.0
        %v2442 = vadd.f32 %v2426, 1.0
        %v2443 = vadd.f32 %v2427, 1.0
        %v2444 = vadd.f32 %v2428, 1.0
        %v2445 = vadd.f32 %v2429, 1.0
        %v2446 = vadd.f32 %v2430, 1.0
        %v2447 = vadd.f32 %v2431, 1.0
        %v2448 = vadd.f32 %v2432, 1.0
        %v2449 = vadd.f32 %v2433, 1.0
        %v2450 = vmul.f32 %v2434, 0.5
        %v2451 = vmul.f32 %v2435, 0.5
        %v2452 = vmul.f32 %v2436, 0.5
        %v2453 = vmul.f32 %v2437, 0.5
        %v2454 = vmul.f32 %v2438, 0.5
        %v2455 = vmul.f32 %v2439, 0.5
        %v2456 = vmul.f32 %v2440, 0.5
        %v2457 = vmul.f32 %v2441, 0.5
        %v2458 = vmul.f32 %v2442, 0.5
        %v2459 = vmul.f32 %v2443, 0.5
        %v2460 = vmul.f32 %v2444, 0.5
        %v2461 = vmul.f32 %v2445, 0.5
        %v2462 = vmul.f32 %v2446, 0.5
        %v2463 = vmul.f32 %v2447, 0.5
        %v2464 = vmul.f32 %v2448, 0.5
        %v2465 = vmul.f32 %v2449, 0.5
        %vm2466 = vcmask 7168
        %2467 = vst.msk [vmem:[%s445] sm:$0xff] %vm2466, %v2450
        %2468 = vst.msk [vmem:[%s445 + $0x8] sm:$0xff] %vm2466, %v2451
        %2469 = vst.msk [vmem:[%s445 + $0x10] sm:$0xff] %vm2466, %v2452
        %2470 = vst.msk [vmem:[%s445 + $0x18] sm:$0xff] %vm2466, %v2453
        %2471 = vst.msk [vmem:[%s445 + $0x20] sm:$0xff] %vm2466, %v2454
        %2472 = vst.msk [vmem:[%s445 + $0x28] sm:$0xff] %vm2466, %v2455
        %2473 = vst.msk [vmem:[%s445 + $0x30] sm:$0xff] %vm2466, %v2456
        %2474 = vst.msk [vmem:[%s445 + $0x38] sm:$0xff] %vm2466, %v2457
        %2475 = vst.msk [vmem:[%s445 + $0x40] sm:$0xff] %vm2466, %v2458
        %2476 = vst.msk [vmem:[%s445 + $0x48] sm:$0xff] %vm2466, %v2459
        %2477 = vst.msk [vmem:[%s445 + $0x50] sm:$0xff] %vm2466, %v2460
        %2478 = vst.msk [vmem:[%s445 + $0x58] sm:$0xff] %vm2466, %v2461
        %2479 = vst.msk [vmem:[%s445 + $0x60] sm:$0xff] %vm2466, %v2462
        %2480 = vst.msk [vmem:[%s445 + $0x68] sm:$0xff] %vm2466, %v2463
        %2481 = vst.msk [vmem:[%s445 + $0x70] sm:$0xff] %vm2466, %v2464
        %2482 = vst.msk [vmem:[%s445 + $0x78] sm:$0xff] %vm2466, %v2465
        %s2483 = smul.u32 16, %s27
        %p2484 = scmp.lt.s32.totalorder %s2483, 31
        %s2485 = scalar_select %p2484, %s2483, 31
        %s2486 = smul.addr %s2485, 8
        %s2487 = scalar_lea.vmem %s12, %s2486
        // Predicated region
        $region81: #{tpu_custom_call.1} parent=63 // pred_check
          %p2488 = pneg %p281
        $region82: #{tpu_custom_call.1} parent=63 // pred_check_branch
          %2490 = sbr.rel (%p2488) target = $region84
        $region83: #{tpu_custom_call.1} parent=63 // pred_region
          %s2491 = smul.u32 16, %s27
        $region84: #{tpu_custom_call.1} parent=63 // pred_fallthru
          _
      $region64: #{tpu_custom_call.1} parent=5 // pred_fallthru
        _
      %p2492 = scmp.le.s32.totalorder 2, %s22
      // Predicated region
      $region85: #{tpu_custom_call.1} parent=5 // pred_check
        %p2493 = pneg %p2492
      $region86: #{tpu_custom_call.1} parent=5 // pred_check_branch
        %2495 = sbr.rel (%p2493) target = $region88
      $region87: #{tpu_custom_call.1} parent=5 // pred_region
        %s2496 = ssub.s32 %s22, 2
        // Predicated region
        $region89: #{tpu_custom_call.1} parent=87 // pred_check
          %p2497 = pneg %p287
        $region90: #{tpu_custom_call.1} parent=87 // pred_check_branch
          %2499 = sbr.rel (%p2497) target = $region92
        $region91: #{tpu_custom_call.1} parent=87 // pred_region
          %s2500 = smul.u32 16, %s28
          %p2501 = scmp.lt.s32.totalorder %s2500, 31
          %s2502 = scalar_select %p2501, %s2500, 31
          %s2503 = smul.addr %s2502, 8
          %s2504 = scalar_lea.vmem %s12, %s2503
        $region92: #{tpu_custom_call.1} parent=87 // pred_fallthru
          _
      $region88: #{tpu_custom_call.1} parent=5 // pred_fallthru
        _
    $region6: #{tpu_custom_call.1} parent=1 // loop_footer
      %s26 = sadd.s32 1, %s22
    $region7: #{tpu_custom_call.1} parent=1 // loop_footer_branch
      %21 = sbr.rel target = $region3
    $region8: #{tpu_custom_call.1} parent=1 // loop_exit
      _
    %2505 = vsyncpa [#allocation5], 1
    %s2506 = scalar_lea.sflag [#allocation5], 1
    %2507 = vsyncpa %s2506, 1
    %2508 = vsyncpa [#allocation7], 1
    %2509 = vsyncpa [#allocation10], 1

</llo_original>
